<compile_context>
chip_gen: v6e
topology: v6e:2x2x1
jax: 0.10.0
libtpu: 0.0.40
codegen_flags: <defaults>
</compile_context>

<pallas_src>
import functools

import jax
import jax.numpy as jnp
import numpy as np
from jax.experimental import pallas as pl
from jax.experimental.pallas import tpu as pltpu


# ---------------------------------------------------------------------------
# helpers
# ---------------------------------------------------------------------------
_VPU_CONV_MAX_CIN = 16  # below this, do the 1x1 conv on the VPU (broadcast FMA)


def _pick_tile(n, target):
    """Lane tile: full dim if it fits, else a multiple of 128 (divisor if possible)."""
    target = max(int(target), 128)
    if n <= target:
        return n
    t = (target // 128) * 128
    while t >= 128:
        if n % t == 0:
            return t
        t -= 128
    # Non-dividing: use a 128-multiple tile; last block is padded, which is
    # safe here because every op is lane-wise independent along pixels.
    return (target // 128) * 128


def _f32_bytes(*shapes):
    return sum(int(np.prod(s)) * 4 for s in shapes)


def _vmem_limit(block_bytes):
    # double-buffered in/out blocks + headroom; actual need is a few MiB, so
    # request little (v7x has only 64 MiB physical VMEM per TensorCore).
    return int(min(max(4 * block_bytes, 8 * 1024 * 1024), 32 * 1024 * 1024))


def _conv1x1_bn_apply(w_ref, s_ref, b_ref, x, c_in):
    """out = (W @ x) * scale + shift, for x of shape (C_in, P)."""
    if c_in <= _VPU_CONV_MAX_CIN:
        # Unrolled VPU broadcast-FMA: the MXU would be <1% utilized here.
        acc = w_ref[:, 0:1] * x[0:1, :]
        for c in range(1, c_in):
            acc = acc + w_ref[:, c:c + 1] * x[c:c + 1, :]
    else:
        acc = jnp.dot(w_ref[...], x, preferred_element_type=jnp.float32)
    return acc * s_ref[...] + b_ref[...]


# ---------------------------------------------------------------------------
# Dense bilinear-interpolation matrix (matches F.interpolate, mode='bilinear',
# align_corners=False):  up_flat = low_flat @ M,  M: (Hy*Wy, H*W).
# ---------------------------------------------------------------------------
def _bilinear_matrix_1d(in_size, out_size):
    scale = in_size / out_size
    s = (np.arange(out_size, dtype=np.float32) + 0.5) * scale - 0.5
    s = np.maximum(s, 0.0)
    i0 = np.minimum(np.floor(s).astype(np.int32), in_size - 1)
    i1 = np.minimum(i0 + 1, in_size - 1)
    w1 = (s - i0.astype(np.float32)).astype(np.float32)
    w0 = (1.0 - w1).astype(np.float32)
    r = np.zeros((in_size, out_size), np.float32)
    cols = np.arange(out_size)
    np.add.at(r, (i0, cols), w0)
    np.add.at(r, (i1, cols), w1)
    return r


def make_bilinear_matrix(src_h, src_w, dst_h, dst_w):
    rh = _bilinear_matrix_1d(src_h, dst_h)          # (src_h, dst_h)
    rw = _bilinear_matrix_1d(src_w, dst_w)          # (src_w, dst_w)
    m = np.einsum("hH,wW->hwHW", rh, rw).reshape(src_h * src_w, dst_h * dst_w)
    return jnp.asarray(m, dtype=jnp.float32)


# ---------------------------------------------------------------------------
# Fused kernel: per (batch, pixel-tile) block, full T folded into the block.
#   y_q_low = BN(Conv1x1_y(y_low))                     (f_y at low res)
#   y_q_up, y_up = bilinear upsample via interp matrix (in VMEM)
#   x_k    = BN(Conv1x1_x(x))                          (f_x)
#   spikes = LIF(y_q_up), LIF(x_k)   (membranes carried across the T loop)
#   sim    = Hamming channel similarity
#   out    = (1 - sim) * x + sim * y_up
# ---------------------------------------------------------------------------
def _pagfm_kernel(x_ref, ylow_ref, m_ref, wx_ref, sx_ref, bx_ref,
                  wy_ref, sy_ref, by_ref, o_ref, *, c_in, c_mid, t_steps):
    interp = m_ref[...]                               # (MY, TN), hoisted out of T loop
    tn = interp.shape[1]

    ux = jnp.zeros((c_mid, tn), jnp.float32)          # LIF membrane for x_k
    uy = jnp.zeros((c_mid, tn), jnp.float32)          # LIF membrane for y_q

    inv_cmid = 1.0 / float(c_mid)

    for t in range(t_steps):                          # T is small & static -> unrolled
        x_t = x_ref[t, 0]                             # (C_in, TN)
        ylow_t = ylow_ref[t, 0]                       # (C_in, MY)

        # f_y at low resolution (conv + folded BN), THEN bilinear upsample —
        # same ordering as the PyTorch module.
        yq_low = _conv1x1_bn_apply(wy_ref, sy_ref, by_ref, ylow_t, c_in)   # (C_mid, MY)
        yq_up = jnp.dot(yq_low, interp, preferred_element_type=jnp.float32)  # (C_mid, TN)
        y_up = jnp.dot(ylow_t, interp, preferred_element_type=jnp.float32)   # (C_in, TN)

        # f_x: 1x1 conv + folded BN at full resolution
        xk = _conv1x1_bn_apply(wx_ref, sx_ref, bx_ref, x_t, c_in)          # (C_mid, TN)

        # LIF for x_k  (decay=0.25, V_th=1.0, forward spike = (u > 0.5))
        ux = ux * 0.25 + xk
        spike_x = (ux > 0.5).astype(jnp.float32)
        ux = ux * (1.0 - spike_x)

        # LIF for y_q (upsampled)
        uy = uy * 0.25 + yq_up
        spike_y = (uy > 0.5).astype(jnp.float32)
        uy = uy * (1.0 - spike_y)

        # Hamming-distance similarity over the channel dim
        sim = jnp.sum((spike_y == spike_x).astype(jnp.float32),
                      axis=0, keepdims=True) * inv_cmid                    # (1, TN)

        o_ref[t, 0] = (1.0 - sim) * x_t + sim * y_up


def pagfm_fused(x4, ylow4, m2, wx, sx, bx, wy, sy, by, *, tile_n=8192):
    """x4: (T,B,C_in,N) full-res, ylow4: (T,B,C_in,MY) low-res, m2: (MY,N)."""
    T, B, c_in, n = x4.shape
    my = ylow4.shape[-1]
    c_mid = wx.shape[0]

    tn = _pick_tile(n, tile_n)
    # v7x: make sure there are >= 2 "parallel" grid units so both TensorCores
    # get work even at B == 1 (no effect on v5e/v6e).
    if B * pl.cdiv(n, tn) < 2 and n >= 256:
        tn = _pick_tile(n, max(128, n // 2))
    grid = (B, pl.cdiv(n, tn))

    block_bytes = _f32_bytes((T, 1, c_in, tn), (T, 1, c_in, my), (my, tn),
                             (T, 1, c_in, tn),
                             (c_mid, c_in), (c_mid, 1), (c_mid, 1),
                             (c_mid, c_in), (c_mid, 1), (c_mid, 1))
    kernel = functools.partial(_pagfm_kernel, c_in=c_in, c_mid=c_mid, t_steps=T)

    return pl.pallas_call(
        kernel,
        out_shape=jax.ShapeDtypeStruct((T, B, c_in, n), jnp.float32),
        grid_spec=pltpu.PrefetchScalarGridSpec(
            num_scalar_prefetch=0,
            grid=grid,
            in_specs=[
                pl.BlockSpec((T, 1, c_in, tn), lambda b, j: (0, b, 0, j)),   # x
                pl.BlockSpec((T, 1, c_in, my), lambda b, j: (0, b, 0, 0)),   # y (low res)
                pl.BlockSpec((my, tn), lambda b, j: (0, j)),                 # interp cols
                pl.BlockSpec((c_mid, c_in), lambda b, j: (0, 0)),            # wx
                pl.BlockSpec((c_mid, 1), lambda b, j: (0, 0)),               # scale_x
                pl.BlockSpec((c_mid, 1), lambda b, j: (0, 0)),               # shift_x
                pl.BlockSpec((c_mid, c_in), lambda b, j: (0, 0)),            # wy
                pl.BlockSpec((c_mid, 1), lambda b, j: (0, 0)),               # scale_y
                pl.BlockSpec((c_mid, 1), lambda b, j: (0, 0)),               # shift_y
            ],
            out_specs=pl.BlockSpec((T, 1, c_in, tn), lambda b, j: (0, b, 0, j)),
        ),
        compiler_params=pltpu.CompilerParams(
            dimension_semantics=("parallel", "parallel"),
            vmem_limit_bytes=_vmem_limit(block_bytes)),
    )(x4, ylow4, m2, wx, sx, bx, wy, sy, by)


def pagfm_forward(x, y, params, *, tile_n=8192):
    """x: (T,B,C_in,H,W), y: (T,B,C_in,Hy,Wy)  ->  (T,B,C_in,H,W)."""
    T, B, C_in, H, W = x.shape
    _, _, _, Hy, Wy = y.shape
    wx, sx, bx, wy, sy, by = (params[k] for k in
                              ("wx", "scale_x", "shift_x", "wy", "scale_y", "shift_y"))

    m2 = make_bilinear_matrix(Hy, Wy, H, W)               # (Hy*Wy, H*W)

    # Contiguous reshapes only — no transposes, no full-res HBM intermediates.
    out4 = pagfm_fused(x.reshape(T, B, C_in, H * W),
                       y.reshape(T, B, C_in, Hy * Wy),
                       m2, wx, sx, bx, wy, sy, by, tile_n=tile_n)
    return out4.reshape(T, B, C_in, H, W)


# ---------------------------------------------------------------------------
# Pure-JAX reference (mirrors the PyTorch module: f_y conv+BN -> bilinear
# upsample -> LIF; f_x conv+BN -> LIF; Hamming similarity; blend with
# upsampled y.  Inference-mode BN; bilinear = align_corners=False).
# ---------------------------------------------------------------------------
def pagfm_reference(x, y, params):
    T, B, C_in, H, W = x.shape
    _, _, _, Hy, Wy = y.shape
    n, my = H * W, Hy * Wy
    wx, sx, bx, wy, sy, by = (params[k] for k in
                              ("wx", "scale_x", "shift_x", "wy", "scale_y", "shift_y"))
    C_mid = wx.shape[0]
    m2 = make_bilinear_matrix(Hy, Wy, H, W)

    x3 = x.reshape(T, B, C_in, n)
    y3 = y.reshape(T, B, C_in, my)

    def convbn(z, w, s, b):
        o = jnp.einsum("mc,tbcp->tbmp", w, z)
        return o * s[None, None, :, 0, None] + b[None, None, :, 0, None]

    def resize(z):                                  # bilinear, align_corners=False
        return jnp.einsum("tbcm,mp->tbcp", z, m2)

    yq_up = resize(convbn(y3, wy, sy, by))          # conv -> upsample (module order)
    xk = convbn(x3, wx, sx, bx)

    def lif(z):
        u = jnp.zeros_like(z[0])
        outs = []
        for t in range(T):
            u = u * 0.25 + z[t]
            s = (u > 0.5).astype(jnp.float32)
            u = u * (1.0 - s)
            outs.append(s)
        return jnp.stack(outs)

    q = lif(yq_up)
    k = lif(xk)
    sim = jnp.sum((q == k).astype(jnp.float32), axis=2, keepdims=True) / float(C_mid)
    y_up = resize(y3)
    out = (1.0 - sim) * x3 + sim * y_up
    return out.reshape(T, B, C_in, H, W)


if __name__ == "__main__":
    T, B, C_in, C_mid = 4, 2, 4, 8
    H = W = 16
    Hy = Wy = 8

    key = jax.random.PRNGKey(0)
    kx, ky, kwx, kwy, kg1, kb1, kg2, kb2 = jax.random.split(key, 8)

    x = jax.random.normal(kx, (T, B, C_in, H, W), dtype=jnp.float32)
    y = jax.random.normal(ky, (T, B, C_in, Hy, Wy), dtype=jnp.float32)

    # Deterministic parameters.  Conv2d(in, mid, k=1, bias=False) -> (mid, in);
    # BatchNorm2d(mid) in inference mode folded to per-channel scale/shift.
    eps = 1e-5
    wx = jax.random.normal(kwx, (C_mid, C_in), dtype=jnp.float32) * 0.5
    wy = jax.random.normal(kwy, (C_mid, C_in), dtype=jnp.float32) * 0.5
    gamma_x = 1.0 + 0.1 * jax.random.normal(kg1, (C_mid,), dtype=jnp.float32)
    beta_x = 0.1 * jax.random.normal(kb1, (C_mid,), dtype=jnp.float32)
    gamma_y = 1.0 + 0.1 * jax.random.normal(kg2, (C_mid,), dtype=jnp.float32)
    beta_y = 0.1 * jax.random.normal(kb2, (C_mid,), dtype=jnp.float32)
    run_mean = jnp.zeros((C_mid,), jnp.float32)
    run_var = jnp.ones((C_mid,), jnp.float32)

    scale_x = (gamma_x / jnp.sqrt(run_var + eps)).reshape(C_mid, 1)
    shift_x = (beta_x - run_mean * gamma_x / jnp.sqrt(run_var + eps)).reshape(C_mid, 1)
    scale_y = (gamma_y / jnp.sqrt(run_var + eps)).reshape(C_mid, 1)
    shift_y = (beta_y - run_mean * gamma_y / jnp.sqrt(run_var + eps)).reshape(C_mid, 1)

    params = dict(wx=wx, scale_x=scale_x, shift_x=shift_x,
                  wy=wy, scale_y=scale_y, shift_y=shift_y)

    out = pagfm_forward(x, y, params)
    out = jax.block_until_ready(out)

    ref = jax.block_until_ready(pagfm_reference(x, y, params))
    np.testing.assert_allclose(np.asarray(out), np.asarray(ref), rtol=1e-5, atol=1e-5)

    print("KERNEL_OK")
</pallas_src>

<mosaic_0001>
module attributes {stable_mosaic.version = 11 : i64} {
  func.func @_pagfm_kernel(%arg0: i32, %arg1: i32, %arg2: memref<4x1x4x256xf32, #tpu.memory_space<vmem>>, %arg3: memref<4x1x4x64xf32, #tpu.memory_space<vmem>>, %arg4: memref<64x256xf32, #tpu.memory_space<vmem>>, %arg5: memref<8x4xf32, #tpu.memory_space<vmem>>, %arg6: memref<8x1xf32, #tpu.memory_space<vmem>>, %arg7: memref<8x1xf32, #tpu.memory_space<vmem>>, %arg8: memref<8x4xf32, #tpu.memory_space<vmem>>, %arg9: memref<8x1xf32, #tpu.memory_space<vmem>>, %arg10: memref<8x1xf32, #tpu.memory_space<vmem>>, %arg11: memref<4x1x4x256xf32, #tpu.memory_space<vmem>>) attributes {dimension_semantics = [#tpu.dimension_semantics<parallel>, #tpu.dimension_semantics<parallel>], iteration_bounds = array<i64: 2, 1>, scalar_prefetch = 0 : i64, scratch_operands = 0 : i64, tpu.core_type = #tpu.core_type<tc>, window_params = [{transform_indices = @transform_0, window_bounds = array<i64: 4, 1, 4, 256>}, {transform_indices = @transform_1, window_bounds = array<i64: 4, 1, 4, 64>}, {transform_indices = @transform_2, window_bounds = array<i64: 64, 256>}, {pipeline_mode = #tpu.pipeline_mode<synchronous>, transform_indices = @transform_3, window_bounds = array<i64: 8, 4>}, {pipeline_mode = #tpu.pipeline_mode<synchronous>, transform_indices = @transform_4, window_bounds = array<i64: 8, 1>}, {pipeline_mode = #tpu.pipeline_mode<synchronous>, transform_indices = @transform_5, window_bounds = array<i64: 8, 1>}, {pipeline_mode = #tpu.pipeline_mode<synchronous>, transform_indices = @transform_6, window_bounds = array<i64: 8, 4>}, {pipeline_mode = #tpu.pipeline_mode<synchronous>, transform_indices = @transform_7, window_bounds = array<i64: 8, 1>}, {pipeline_mode = #tpu.pipeline_mode<synchronous>, transform_indices = @transform_8, window_bounds = array<i64: 8, 1>}, {transform_indices = @transform_9, window_bounds = array<i64: 4, 1, 4, 256>}]} {
    %c0 = arith.constant 0 : index
    %c0_0 = arith.constant 0 : index
    %0 = vector.load %arg4[%c0, %c0_0] : memref<64x256xf32, #tpu.memory_space<vmem>>, vector<64x256xf32>
    %cst = arith.constant 0.000000e+00 : f32
    %1 = vector.broadcast %cst : f32 to vector<8x256xf32>
    %cst_1 = arith.constant 0.000000e+00 : f32
    %2 = vector.broadcast %cst_1 : f32 to vector<8x256xf32>
    %c0_2 = arith.constant 0 : index
    %c0_3 = arith.constant 0 : index
    %c0_4 = arith.constant 0 : index
    %c0_5 = arith.constant 0 : index
    %3 = vector.load %arg2[%c0_2, %c0_3, %c0_4, %c0_5] : memref<4x1x4x256xf32, #tpu.memory_space<vmem>>, vector<1x1x4x256xf32>
    %4 = vector.shape_cast %3 : vector<1x1x4x256xf32> to vector<4x256xf32>
    %c0_6 = arith.constant 0 : index
    %c0_7 = arith.constant 0 : index
    %c0_8 = arith.constant 0 : index
    %c0_9 = arith.constant 0 : index
    %5 = vector.load %arg3[%c0_6, %c0_7, %c0_8, %c0_9] : memref<4x1x4x64xf32, #tpu.memory_space<vmem>>, vector<1x1x4x64xf32>
    %6 = vector.shape_cast %5 : vector<1x1x4x64xf32> to vector<4x64xf32>
    %c0_10 = arith.constant 0 : index
    %c0_11 = arith.constant 0 : index
    %7 = vector.load %arg8[%c0_10, %c0_11] : memref<8x4xf32, #tpu.memory_space<vmem>>, vector<8x1xf32>
    %8 = vector.extract_strided_slice %6 {offsets = [0, 0], sizes = [1, 64], strides = [1, 1]} : vector<4x64xf32> to vector<1x64xf32>
    %9 = vector.broadcast %7 : vector<8x1xf32> to vector<8x64xf32>
    %10 = vector.broadcast %8 : vector<1x64xf32> to vector<8x64xf32>
    %11 = arith.mulf %9, %10 : vector<8x64xf32>
    %c0_12 = arith.constant 0 : index
    %c1 = arith.constant 1 : index
    %12 = vector.load %arg8[%c0_12, %c1] : memref<8x4xf32, #tpu.memory_space<vmem>>, vector<8x1xf32>
    %13 = vector.extract_strided_slice %6 {offsets = [1, 0], sizes = [1, 64], strides = [1, 1]} : vector<4x64xf32> to vector<1x64xf32>
    %14 = vector.broadcast %12 : vector<8x1xf32> to vector<8x64xf32>
    %15 = vector.broadcast %13 : vector<1x64xf32> to vector<8x64xf32>
    %16 = arith.mulf %14, %15 : vector<8x64xf32>
    %17 = arith.addf %11, %16 : vector<8x64xf32>
    %c0_13 = arith.constant 0 : index
    %c2 = arith.constant 2 : index
    %18 = vector.load %arg8[%c0_13, %c2] : memref<8x4xf32, #tpu.memory_space<vmem>>, vector<8x1xf32>
    %19 = vector.extract_strided_slice %6 {offsets = [2, 0], sizes = [1, 64], strides = [1, 1]} : vector<4x64xf32> to vector<1x64xf32>
    %20 = vector.broadcast %18 : vector<8x1xf32> to vector<8x64xf32>
    %21 = vector.broadcast %19 : vector<1x64xf32> to vector<8x64xf32>
    %22 = arith.mulf %20, %21 : vector<8x64xf32>
    %23 = arith.addf %17, %22 : vector<8x64xf32>
    %c0_14 = arith.constant 0 : index
    %c3 = arith.constant 3 : index
    %24 = vector.load %arg8[%c0_14, %c3] : memref<8x4xf32, #tpu.memory_space<vmem>>, vector<8x1xf32>
    %25 = vector.extract_strided_slice %6 {offsets = [3, 0], sizes = [1, 64], strides = [1, 1]} : vector<4x64xf32> to vector<1x64xf32>
    %26 = vector.broadcast %24 : vector<8x1xf32> to vector<8x64xf32>
    %27 = vector.broadcast %25 : vector<1x64xf32> to vector<8x64xf32>
    %28 = arith.mulf %26, %27 : vector<8x64xf32>
    %29 = arith.addf %23, %28 : vector<8x64xf32>
    %c0_15 = arith.constant 0 : index
    %c0_16 = arith.constant 0 : index
    %30 = vector.load %arg9[%c0_15, %c0_16] : memref<8x1xf32, #tpu.memory_space<vmem>>, vector<8x1xf32>
    %31 = vector.broadcast %30 : vector<8x1xf32> to vector<8x64xf32>
    %32 = arith.mulf %29, %31 : vector<8x64xf32>
    %c0_17 = arith.constant 0 : index
    %c0_18 = arith.constant 0 : index
    %33 = vector.load %arg10[%c0_17, %c0_18] : memref<8x1xf32, #tpu.memory_space<vmem>>, vector<8x1xf32>
    %34 = vector.broadcast %33 : vector<8x1xf32> to vector<8x64xf32>
    %35 = arith.addf %32, %34 : vector<8x64xf32>
    %cst_19 = arith.constant dense<0.000000e+00> : vector<8x256xf32>
    %36 = tpu.matmul %35, %0, %cst_19 {dimension_numbers = #tpu.dot_dimension_numbers<[1], [0], [0], [1], [0, 0, 1, 1], [], []>} : vector<8x64xf32>, vector<64x256xf32>, vector<8x256xf32> -> vector<8x256xf32>
    %cst_20 = arith.constant dense<0.000000e+00> : vector<4x256xf32>
    %37 = tpu.matmul %6, %0, %cst_20 {dimension_numbers = #tpu.dot_dimension_numbers<[1], [0], [0], [1], [0, 0, 1, 1], [], []>} : vector<4x64xf32>, vector<64x256xf32>, vector<4x256xf32> -> vector<4x256xf32>
    %c0_21 = arith.constant 0 : index
    %c0_22 = arith.constant 0 : index
    %38 = vector.load %arg5[%c0_21, %c0_22] : memref<8x4xf32, #tpu.memory_space<vmem>>, vector<8x1xf32>
    %39 = vector.extract_strided_slice %4 {offsets = [0, 0], sizes = [1, 256], strides = [1, 1]} : vector<4x256xf32> to vector<1x256xf32>
    %40 = vector.broadcast %38 : vector<8x1xf32> to vector<8x256xf32>
    %41 = vector.broadcast %39 : vector<1x256xf32> to vector<8x256xf32>
    %42 = arith.mulf %40, %41 : vector<8x256xf32>
    %c0_23 = arith.constant 0 : index
    %c1_24 = arith.constant 1 : index
    %43 = vector.load %arg5[%c0_23, %c1_24] : memref<8x4xf32, #tpu.memory_space<vmem>>, vector<8x1xf32>
    %44 = vector.extract_strided_slice %4 {offsets = [1, 0], sizes = [1, 256], strides = [1, 1]} : vector<4x256xf32> to vector<1x256xf32>
    %45 = vector.broadcast %43 : vector<8x1xf32> to vector<8x256xf32>
    %46 = vector.broadcast %44 : vector<1x256xf32> to vector<8x256xf32>
    %47 = arith.mulf %45, %46 : vector<8x256xf32>
    %48 = arith.addf %42, %47 : vector<8x256xf32>
    %c0_25 = arith.constant 0 : index
    %c2_26 = arith.constant 2 : index
    %49 = vector.load %arg5[%c0_25, %c2_26] : memref<8x4xf32, #tpu.memory_space<vmem>>, vector<8x1xf32>
    %50 = vector.extract_strided_slice %4 {offsets = [2, 0], sizes = [1, 256], strides = [1, 1]} : vector<4x256xf32> to vector<1x256xf32>
    %51 = vector.broadcast %49 : vector<8x1xf32> to vector<8x256xf32>
    %52 = vector.broadcast %50 : vector<1x256xf32> to vector<8x256xf32>
    %53 = arith.mulf %51, %52 : vector<8x256xf32>
    %54 = arith.addf %48, %53 : vector<8x256xf32>
    %c0_27 = arith.constant 0 : index
    %c3_28 = arith.constant 3 : index
    %55 = vector.load %arg5[%c0_27, %c3_28] : memref<8x4xf32, #tpu.memory_space<vmem>>, vector<8x1xf32>
    %56 = vector.extract_strided_slice %4 {offsets = [3, 0], sizes = [1, 256], strides = [1, 1]} : vector<4x256xf32> to vector<1x256xf32>
    %57 = vector.broadcast %55 : vector<8x1xf32> to vector<8x256xf32>
    %58 = vector.broadcast %56 : vector<1x256xf32> to vector<8x256xf32>
    %59 = arith.mulf %57, %58 : vector<8x256xf32>
    %60 = arith.addf %54, %59 : vector<8x256xf32>
    %c0_29 = arith.constant 0 : index
    %c0_30 = arith.constant 0 : index
    %61 = vector.load %arg6[%c0_29, %c0_30] : memref<8x1xf32, #tpu.memory_space<vmem>>, vector<8x1xf32>
    %62 = vector.broadcast %61 : vector<8x1xf32> to vector<8x256xf32>
    %63 = arith.mulf %60, %62 : vector<8x256xf32>
    %c0_31 = arith.constant 0 : index
    %c0_32 = arith.constant 0 : index
    %64 = vector.load %arg7[%c0_31, %c0_32] : memref<8x1xf32, #tpu.memory_space<vmem>>, vector<8x1xf32>
    %65 = vector.broadcast %64 : vector<8x1xf32> to vector<8x256xf32>
    %66 = arith.addf %63, %65 : vector<8x256xf32>
    %cst_33 = arith.constant 2.500000e-01 : f32
    %67 = vector.broadcast %cst_33 : f32 to vector<8x256xf32>
    %68 = arith.mulf %1, %67 : vector<8x256xf32>
    %69 = arith.addf %68, %66 : vector<8x256xf32>
    %cst_34 = arith.constant 5.000000e-01 : f32
    %70 = vector.broadcast %cst_34 : f32 to vector<8x256xf32>
    %71 = arith.cmpf ogt, %69, %70 : vector<8x256xf32>
    %72 = arith.extui %71 : vector<8x256xi1> to vector<8x256xi32>
    %73 = arith.sitofp %72 : vector<8x256xi32> to vector<8x256xf32>
    %cst_35 = arith.constant 1.000000e+00 : f32
    %74 = vector.broadcast %cst_35 : f32 to vector<8x256xf32>
    %75 = arith.subf %74, %73 : vector<8x256xf32>
    %76 = arith.mulf %69, %75 : vector<8x256xf32>
    %cst_36 = arith.constant 2.500000e-01 : f32
    %77 = vector.broadcast %cst_36 : f32 to vector<8x256xf32>
    %78 = arith.mulf %2, %77 : vector<8x256xf32>
    %79 = arith.addf %78, %36 : vector<8x256xf32>
    %cst_37 = arith.constant 5.000000e-01 : f32
    %80 = vector.broadcast %cst_37 : f32 to vector<8x256xf32>
    %81 = arith.cmpf ogt, %79, %80 : vector<8x256xf32>
    %82 = arith.extui %81 : vector<8x256xi1> to vector<8x256xi32>
    %83 = arith.sitofp %82 : vector<8x256xi32> to vector<8x256xf32>
    %cst_38 = arith.constant 1.000000e+00 : f32
    %84 = vector.broadcast %cst_38 : f32 to vector<8x256xf32>
    %85 = arith.subf %84, %83 : vector<8x256xf32>
    %86 = arith.mulf %79, %85 : vector<8x256xf32>
    %87 = arith.cmpf oeq, %83, %73 : vector<8x256xf32>
    %88 = arith.extui %87 : vector<8x256xi1> to vector<8x256xi32>
    %89 = arith.sitofp %88 : vector<8x256xi32> to vector<8x256xf32>
    %cst_39 = arith.constant dense<0.000000e+00> : vector<256xf32>
    %90 = vector.multi_reduction <add>, %89, %cst_39 [0] : vector<8x256xf32> to vector<256xf32>
    %91 = vector.shape_cast %90 : vector<256xf32> to vector<1x256xf32>
    %cst_40 = arith.constant 1.250000e-01 : f32
    %92 = vector.broadcast %cst_40 : f32 to vector<1x256xf32>
    %93 = arith.mulf %91, %92 : vector<1x256xf32>
    %cst_41 = arith.constant 1.000000e+00 : f32
    %94 = vector.broadcast %cst_41 : f32 to vector<1x256xf32>
    %95 = arith.subf %94, %93 : vector<1x256xf32>
    %96 = vector.broadcast %95 : vector<1x256xf32> to vector<4x256xf32>
    %97 = arith.mulf %96, %4 : vector<4x256xf32>
    %98 = vector.broadcast %93 : vector<1x256xf32> to vector<4x256xf32>
    %99 = arith.mulf %98, %37 : vector<4x256xf32>
    %100 = arith.addf %97, %99 : vector<4x256xf32>
    %c0_42 = arith.constant 0 : index
    %c0_43 = arith.constant 0 : index
    %c0_44 = arith.constant 0 : index
    %c0_45 = arith.constant 0 : index
    %101 = vector.load %arg11[%c0_42, %c0_43, %c0_44, %c0_45] : memref<4x1x4x256xf32, #tpu.memory_space<vmem>>, vector<1x1x4x256xf32>
    %102 = vector.shape_cast %101 : vector<1x1x4x256xf32> to vector<4x256xf32>
    %103 = vector.shape_cast %100 : vector<4x256xf32> to vector<1x1x4x256xf32>
    tpu.vector_store %arg11[%c0_42, %c0_43, %c0_44, %c0_45], %103 {strides = array<i32>} : memref<4x1x4x256xf32, #tpu.memory_space<vmem>>, vector<1x1x4x256xf32>,
    %c1_46 = arith.constant 1 : index
    %c0_47 = arith.constant 0 : index
    %c0_48 = arith.constant 0 : index
    %c0_49 = arith.constant 0 : index
    %104 = vector.load %arg2[%c1_46, %c0_47, %c0_48, %c0_49] : memref<4x1x4x256xf32, #tpu.memory_space<vmem>>, vector<1x1x4x256xf32>
    %105 = vector.shape_cast %104 : vector<1x1x4x256xf32> to vector<4x256xf32>
    %c1_50 = arith.constant 1 : index
    %c0_51 = arith.constant 0 : index
    %c0_52 = arith.constant 0 : index
    %c0_53 = arith.constant 0 : index
    %106 = vector.load %arg3[%c1_50, %c0_51, %c0_52, %c0_53] : memref<4x1x4x64xf32, #tpu.memory_space<vmem>>, vector<1x1x4x64xf32>
    %107 = vector.shape_cast %106 : vector<1x1x4x64xf32> to vector<4x64xf32>
    %c0_54 = arith.constant 0 : index
    %c0_55 = arith.constant 0 : index
    %108 = vector.load %arg8[%c0_54, %c0_55] : memref<8x4xf32, #tpu.memory_space<vmem>>, vector<8x1xf32>
    %109 = vector.extract_strided_slice %107 {offsets = [0, 0], sizes = [1, 64], strides = [1, 1]} : vector<4x64xf32> to vector<1x64xf32>
    %110 = vector.broadcast %108 : vector<8x1xf32> to vector<8x64xf32>
    %111 = vector.broadcast %109 : vector<1x64xf32> to vector<8x64xf32>
    %112 = arith.mulf %110, %111 : vector<8x64xf32>
    %c0_56 = arith.constant 0 : index
    %c1_57 = arith.constant 1 : index
    %113 = vector.load %arg8[%c0_56, %c1_57] : memref<8x4xf32, #tpu.memory_space<vmem>>, vector<8x1xf32>
    %114 = vector.extract_strided_slice %107 {offsets = [1, 0], sizes = [1, 64], strides = [1, 1]} : vector<4x64xf32> to vector<1x64xf32>
    %115 = vector.broadcast %113 : vector<8x1xf32> to vector<8x64xf32>
    %116 = vector.broadcast %114 : vector<1x64xf32> to vector<8x64xf32>
    %117 = arith.mulf %115, %116 : vector<8x64xf32>
    %118 = arith.addf %112, %117 : vector<8x64xf32>
    %c0_58 = arith.constant 0 : index
    %c2_59 = arith.constant 2 : index
    %119 = vector.load %arg8[%c0_58, %c2_59] : memref<8x4xf32, #tpu.memory_space<vmem>>, vector<8x1xf32>
    %120 = vector.extract_strided_slice %107 {offsets = [2, 0], sizes = [1, 64], strides = [1, 1]} : vector<4x64xf32> to vector<1x64xf32>
    %121 = vector.broadcast %119 : vector<8x1xf32> to vector<8x64xf32>
    %122 = vector.broadcast %120 : vector<1x64xf32> to vector<8x64xf32>
    %123 = arith.mulf %121, %122 : vector<8x64xf32>
    %124 = arith.addf %118, %123 : vector<8x64xf32>
    %c0_60 = arith.constant 0 : index
    %c3_61 = arith.constant 3 : index
    %125 = vector.load %arg8[%c0_60, %c3_61] : memref<8x4xf32, #tpu.memory_space<vmem>>, vector<8x1xf32>
    %126 = vector.extract_strided_slice %107 {offsets = [3, 0], sizes = [1, 64], strides = [1, 1]} : vector<4x64xf32> to vector<1x64xf32>
    %127 = vector.broadcast %125 : vector<8x1xf32> to vector<8x64xf32>
    %128 = vector.broadcast %126 : vector<1x64xf32> to vector<8x64xf32>
    %129 = arith.mulf %127, %128 : vector<8x64xf32>
    %130 = arith.addf %124, %129 : vector<8x64xf32>
    %c0_62 = arith.constant 0 : index
    %c0_63 = arith.constant 0 : index
    %131 = vector.load %arg9[%c0_62, %c0_63] : memref<8x1xf32, #tpu.memory_space<vmem>>, vector<8x1xf32>
    %132 = vector.broadcast %131 : vector<8x1xf32> to vector<8x64xf32>
    %133 = arith.mulf %130, %132 : vector<8x64xf32>
    %c0_64 = arith.constant 0 : index
    %c0_65 = arith.constant 0 : index
    %134 = vector.load %arg10[%c0_64, %c0_65] : memref<8x1xf32, #tpu.memory_space<vmem>>, vector<8x1xf32>
    %135 = vector.broadcast %134 : vector<8x1xf32> to vector<8x64xf32>
    %136 = arith.addf %133, %135 : vector<8x64xf32>
    %cst_66 = arith.constant dense<0.000000e+00> : vector<8x256xf32>
    %137 = tpu.matmul %136, %0, %cst_66 {dimension_numbers = #tpu.dot_dimension_numbers<[1], [0], [0], [1], [0, 0, 1, 1], [], []>} : vector<8x64xf32>, vector<64x256xf32>, vector<8x256xf32> -> vector<8x256xf32>
    %cst_67 = arith.constant dense<0.000000e+00> : vector<4x256xf32>
    %138 = tpu.matmul %107, %0, %cst_67 {dimension_numbers = #tpu.dot_dimension_numbers<[1], [0], [0], [1], [0, 0, 1, 1], [], []>} : vector<4x64xf32>, vector<64x256xf32>, vector<4x256xf32> -> vector<4x256xf32>
    %c0_68 = arith.constant 0 : index
    %c0_69 = arith.constant 0 : index
    %139 = vector.load %arg5[%c0_68, %c0_69] : memref<8x4xf32, #tpu.memory_space<vmem>>, vector<8x1xf32>
    %140 = vector.extract_strided_slice %105 {offsets = [0, 0], sizes = [1, 256], strides = [1, 1]} : vector<4x256xf32> to vector<1x256xf32>
    %141 = vector.broadcast %139 : vector<8x1xf32> to vector<8x256xf32>
    %142 = vector.broadcast %140 : vector<1x256xf32> to vector<8x256xf32>
    %143 = arith.mulf %141, %142 : vector<8x256xf32>
    %c0_70 = arith.constant 0 : index
    %c1_71 = arith.constant 1 : index
    %144 = vector.load %arg5[%c0_70, %c1_71] : memref<8x4xf32, #tpu.memory_space<vmem>>, vector<8x1xf32>
    %145 = vector.extract_strided_slice %105 {offsets = [1, 0], sizes = [1, 256], strides = [1, 1]} : vector<4x256xf32> to vector<1x256xf32>
    %146 = vector.broadcast %144 : vector<8x1xf32> to vector<8x256xf32>
    %147 = vector.broadcast %145 : vector<1x256xf32> to vector<8x256xf32>
    %148 = arith.mulf %146, %147 : vector<8x256xf32>
    %149 = arith.addf %143, %148 : vector<8x256xf32>
    %c0_72 = arith.constant 0 : index
    %c2_73 = arith.constant 2 : index
    %150 = vector.load %arg5[%c0_72, %c2_73] : memref<8x4xf32, #tpu.memory_space<vmem>>, vector<8x1xf32>
    %151 = vector.extract_strided_slice %105 {offsets = [2, 0], sizes = [1, 256], strides = [1, 1]} : vector<4x256xf32> to vector<1x256xf32>
    %152 = vector.broadcast %150 : vector<8x1xf32> to vector<8x256xf32>
    %153 = vector.broadcast %151 : vector<1x256xf32> to vector<8x256xf32>
    %154 = arith.mulf %152, %153 : vector<8x256xf32>
    %155 = arith.addf %149, %154 : vector<8x256xf32>
    %c0_74 = arith.constant 0 : index
    %c3_75 = arith.constant 3 : index
    %156 = vector.load %arg5[%c0_74, %c3_75] : memref<8x4xf32, #tpu.memory_space<vmem>>, vector<8x1xf32>
    %157 = vector.extract_strided_slice %105 {offsets = [3, 0], sizes = [1, 256], strides = [1, 1]} : vector<4x256xf32> to vector<1x256xf32>
    %158 = vector.broadcast %156 : vector<8x1xf32> to vector<8x256xf32>
    %159 = vector.broadcast %157 : vector<1x256xf32> to vector<8x256xf32>
    %160 = arith.mulf %158, %159 : vector<8x256xf32>
    %161 = arith.addf %155, %160 : vector<8x256xf32>
    %c0_76 = arith.constant 0 : index
    %c0_77 = arith.constant 0 : index
    %162 = vector.load %arg6[%c0_76, %c0_77] : memref<8x1xf32, #tpu.memory_space<vmem>>, vector<8x1xf32>
    %163 = vector.broadcast %162 : vector<8x1xf32> to vector<8x256xf32>
    %164 = arith.mulf %161, %163 : vector<8x256xf32>
    %c0_78 = arith.constant 0 : index
    %c0_79 = arith.constant 0 : index
    %165 = vector.load %arg7[%c0_78, %c0_79] : memref<8x1xf32, #tpu.memory_space<vmem>>, vector<8x1xf32>
    %166 = vector.broadcast %165 : vector<8x1xf32> to vector<8x256xf32>
    %167 = arith.addf %164, %166 : vector<8x256xf32>
    %cst_80 = arith.constant 2.500000e-01 : f32
    %168 = vector.broadcast %cst_80 : f32 to vector<8x256xf32>
    %169 = arith.mulf %76, %168 : vector<8x256xf32>
    %170 = arith.addf %169, %167 : vector<8x256xf32>
    %cst_81 = arith.constant 5.000000e-01 : f32
    %171 = vector.broadcast %cst_81 : f32 to vector<8x256xf32>
    %172 = arith.cmpf ogt, %170, %171 : vector<8x256xf32>
    %173 = arith.extui %172 : vector<8x256xi1> to vector<8x256xi32>
    %174 = arith.sitofp %173 : vector<8x256xi32> to vector<8x256xf32>
    %cst_82 = arith.constant 1.000000e+00 : f32
    %175 = vector.broadcast %cst_82 : f32 to vector<8x256xf32>
    %176 = arith.subf %175, %174 : vector<8x256xf32>
    %177 = arith.mulf %170, %176 : vector<8x256xf32>
    %cst_83 = arith.constant 2.500000e-01 : f32
    %178 = vector.broadcast %cst_83 : f32 to vector<8x256xf32>
    %179 = arith.mulf %86, %178 : vector<8x256xf32>
    %180 = arith.addf %179, %137 : vector<8x256xf32>
    %cst_84 = arith.constant 5.000000e-01 : f32
    %181 = vector.broadcast %cst_84 : f32 to vector<8x256xf32>
    %182 = arith.cmpf ogt, %180, %181 : vector<8x256xf32>
    %183 = arith.extui %182 : vector<8x256xi1> to vector<8x256xi32>
    %184 = arith.sitofp %183 : vector<8x256xi32> to vector<8x256xf32>
    %cst_85 = arith.constant 1.000000e+00 : f32
    %185 = vector.broadcast %cst_85 : f32 to vector<8x256xf32>
    %186 = arith.subf %185, %184 : vector<8x256xf32>
    %187 = arith.mulf %180, %186 : vector<8x256xf32>
    %188 = arith.cmpf oeq, %184, %174 : vector<8x256xf32>
    %189 = arith.extui %188 : vector<8x256xi1> to vector<8x256xi32>
    %190 = arith.sitofp %189 : vector<8x256xi32> to vector<8x256xf32>
    %cst_86 = arith.constant dense<0.000000e+00> : vector<256xf32>
    %191 = vector.multi_reduction <add>, %190, %cst_86 [0] : vector<8x256xf32> to vector<256xf32>
    %192 = vector.shape_cast %191 : vector<256xf32> to vector<1x256xf32>
    %cst_87 = arith.constant 1.250000e-01 : f32
    %193 = vector.broadcast %cst_87 : f32 to vector<1x256xf32>
    %194 = arith.mulf %192, %193 : vector<1x256xf32>
    %cst_88 = arith.constant 1.000000e+00 : f32
    %195 = vector.broadcast %cst_88 : f32 to vector<1x256xf32>
    %196 = arith.subf %195, %194 : vector<1x256xf32>
    %197 = vector.broadcast %196 : vector<1x256xf32> to vector<4x256xf32>
    %198 = arith.mulf %197, %105 : vector<4x256xf32>
    %199 = vector.broadcast %194 : vector<1x256xf32> to vector<4x256xf32>
    %200 = arith.mulf %199, %138 : vector<4x256xf32>
    %201 = arith.addf %198, %200 : vector<4x256xf32>
    %c1_89 = arith.constant 1 : index
    %c0_90 = arith.constant 0 : index
    %c0_91 = arith.constant 0 : index
    %c0_92 = arith.constant 0 : index
    %202 = vector.load %arg11[%c1_89, %c0_90, %c0_91, %c0_92] : memref<4x1x4x256xf32, #tpu.memory_space<vmem>>, vector<1x1x4x256xf32>
    %203 = vector.shape_cast %202 : vector<1x1x4x256xf32> to vector<4x256xf32>
    %204 = vector.shape_cast %201 : vector<4x256xf32> to vector<1x1x4x256xf32>
    tpu.vector_store %arg11[%c1_89, %c0_90, %c0_91, %c0_92], %204 {strides = array<i32>} : memref<4x1x4x256xf32, #tpu.memory_space<vmem>>, vector<1x1x4x256xf32>,
    %c2_93 = arith.constant 2 : index
    %c0_94 = arith.constant 0 : index
    %c0_95 = arith.constant 0 : index
    %c0_96 = arith.constant 0 : index
    %205 = vector.load %arg2[%c2_93, %c0_94, %c0_95, %c0_96] : memref<4x1x4x256xf32, #tpu.memory_space<vmem>>, vector<1x1x4x256xf32>
    %206 = vector.shape_cast %205 : vector<1x1x4x256xf32> to vector<4x256xf32>
    %c2_97 = arith.constant 2 : index
    %c0_98 = arith.constant 0 : index
    %c0_99 = arith.constant 0 : index
    %c0_100 = arith.constant 0 : index
    %207 = vector.load %arg3[%c2_97, %c0_98, %c0_99, %c0_100] : memref<4x1x4x64xf32, #tpu.memory_space<vmem>>, vector<1x1x4x64xf32>
    %208 = vector.shape_cast %207 : vector<1x1x4x64xf32> to vector<4x64xf32>
    %c0_101 = arith.constant 0 : index
    %c0_102 = arith.constant 0 : index
    %209 = vector.load %arg8[%c0_101, %c0_102] : memref<8x4xf32, #tpu.memory_space<vmem>>, vector<8x1xf32>
    %210 = vector.extract_strided_slice %208 {offsets = [0, 0], sizes = [1, 64], strides = [1, 1]} : vector<4x64xf32> to vector<1x64xf32>
    %211 = vector.broadcast %209 : vector<8x1xf32> to vector<8x64xf32>
    %212 = vector.broadcast %210 : vector<1x64xf32> to vector<8x64xf32>
    %213 = arith.mulf %211, %212 : vector<8x64xf32>
    %c0_103 = arith.constant 0 : index
    %c1_104 = arith.constant 1 : index
    %214 = vector.load %arg8[%c0_103, %c1_104] : memref<8x4xf32, #tpu.memory_space<vmem>>, vector<8x1xf32>
    %215 = vector.extract_strided_slice %208 {offsets = [1, 0], sizes = [1, 64], strides = [1, 1]} : vector<4x64xf32> to vector<1x64xf32>
    %216 = vector.broadcast %214 : vector<8x1xf32> to vector<8x64xf32>
    %217 = vector.broadcast %215 : vector<1x64xf32> to vector<8x64xf32>
    %218 = arith.mulf %216, %217 : vector<8x64xf32>
    %219 = arith.addf %213, %218 : vector<8x64xf32>
    %c0_105 = arith.constant 0 : index
    %c2_106 = arith.constant 2 : index
    %220 = vector.load %arg8[%c0_105, %c2_106] : memref<8x4xf32, #tpu.memory_space<vmem>>, vector<8x1xf32>
    %221 = vector.extract_strided_slice %208 {offsets = [2, 0], sizes = [1, 64], strides = [1, 1]} : vector<4x64xf32> to vector<1x64xf32>
    %222 = vector.broadcast %220 : vector<8x1xf32> to vector<8x64xf32>
    %223 = vector.broadcast %221 : vector<1x64xf32> to vector<8x64xf32>
    %224 = arith.mulf %222, %223 : vector<8x64xf32>
    %225 = arith.addf %219, %224 : vector<8x64xf32>
    %c0_107 = arith.constant 0 : index
    %c3_108 = arith.constant 3 : index
    %226 = vector.load %arg8[%c0_107, %c3_108] : memref<8x4xf32, #tpu.memory_space<vmem>>, vector<8x1xf32>
    %227 = vector.extract_strided_slice %208 {offsets = [3, 0], sizes = [1, 64], strides = [1, 1]} : vector<4x64xf32> to vector<1x64xf32>
    %228 = vector.broadcast %226 : vector<8x1xf32> to vector<8x64xf32>
    %229 = vector.broadcast %227 : vector<1x64xf32> to vector<8x64xf32>
    %230 = arith.mulf %228, %229 : vector<8x64xf32>
    %231 = arith.addf %225, %230 : vector<8x64xf32>
    %c0_109 = arith.constant 0 : index
    %c0_110 = arith.constant 0 : index
    %232 = vector.load %arg9[%c0_109, %c0_110] : memref<8x1xf32, #tpu.memory_space<vmem>>, vector<8x1xf32>
    %233 = vector.broadcast %232 : vector<8x1xf32> to vector<8x64xf32>
    %234 = arith.mulf %231, %233 : vector<8x64xf32>
    %c0_111 = arith.constant 0 : index
    %c0_112 = arith.constant 0 : index
    %235 = vector.load %arg10[%c0_111, %c0_112] : memref<8x1xf32, #tpu.memory_space<vmem>>, vector<8x1xf32>
    %236 = vector.broadcast %235 : vector<8x1xf32> to vector<8x64xf32>
    %237 = arith.addf %234, %236 : vector<8x64xf32>
    %cst_113 = arith.constant dense<0.000000e+00> : vector<8x256xf32>
    %238 = tpu.matmul %237, %0, %cst_113 {dimension_numbers = #tpu.dot_dimension_numbers<[1], [0], [0], [1], [0, 0, 1, 1], [], []>} : vector<8x64xf32>, vector<64x256xf32>, vector<8x256xf32> -> vector<8x256xf32>
    %cst_114 = arith.constant dense<0.000000e+00> : vector<4x256xf32>
    %239 = tpu.matmul %208, %0, %cst_114 {dimension_numbers = #tpu.dot_dimension_numbers<[1], [0], [0], [1], [0, 0, 1, 1], [], []>} : vector<4x64xf32>, vector<64x256xf32>, vector<4x256xf32> -> vector<4x256xf32>
    %c0_115 = arith.constant 0 : index
    %c0_116 = arith.constant 0 : index
    %240 = vector.load %arg5[%c0_115, %c0_116] : memref<8x4xf32, #tpu.memory_space<vmem>>, vector<8x1xf32>
    %241 = vector.extract_strided_slice %206 {offsets = [0, 0], sizes = [1, 256], strides = [1, 1]} : vector<4x256xf32> to vector<1x256xf32>
    %242 = vector.broadcast %240 : vector<8x1xf32> to vector<8x256xf32>
    %243 = vector.broadcast %241 : vector<1x256xf32> to vector<8x256xf32>
    %244 = arith.mulf %242, %243 : vector<8x256xf32>
    %c0_117 = arith.constant 0 : index
    %c1_118 = arith.constant 1 : index
    %245 = vector.load %arg5[%c0_117, %c1_118] : memref<8x4xf32, #tpu.memory_space<vmem>>, vector<8x1xf32>
    %246 = vector.extract_strided_slice %206 {offsets = [1, 0], sizes = [1, 256], strides = [1, 1]} : vector<4x256xf32> to vector<1x256xf32>
    %247 = vector.broadcast %245 : vector<8x1xf32> to vector<8x256xf32>
    %248 = vector.broadcast %246 : vector<1x256xf32> to vector<8x256xf32>
    %249 = arith.mulf %247, %248 : vector<8x256xf32>
    %250 = arith.addf %244, %249 : vector<8x256xf32>
    %c0_119 = arith.constant 0 : index
    %c2_120 = arith.constant 2 : index
    %251 = vector.load %arg5[%c0_119, %c2_120] : memref<8x4xf32, #tpu.memory_space<vmem>>, vector<8x1xf32>
    %252 = vector.extract_strided_slice %206 {offsets = [2, 0], sizes = [1, 256], strides = [1, 1]} : vector<4x256xf32> to vector<1x256xf32>
    %253 = vector.broadcast %251 : vector<8x1xf32> to vector<8x256xf32>
    %254 = vector.broadcast %252 : vector<1x256xf32> to vector<8x256xf32>
    %255 = arith.mulf %253, %254 : vector<8x256xf32>
    %256 = arith.addf %250, %255 : vector<8x256xf32>
    %c0_121 = arith.constant 0 : index
    %c3_122 = arith.constant 3 : index
    %257 = vector.load %arg5[%c0_121, %c3_122] : memref<8x4xf32, #tpu.memory_space<vmem>>, vector<8x1xf32>
    %258 = vector.extract_strided_slice %206 {offsets = [3, 0], sizes = [1, 256], strides = [1, 1]} : vector<4x256xf32> to vector<1x256xf32>
    %259 = vector.broadcast %257 : vector<8x1xf32> to vector<8x256xf32>
    %260 = vector.broadcast %258 : vector<1x256xf32> to vector<8x256xf32>
    %261 = arith.mulf %259, %260 : vector<8x256xf32>
    %262 = arith.addf %256, %261 : vector<8x256xf32>
    %c0_123 = arith.constant 0 : index
    %c0_124 = arith.constant 0 : index
    %263 = vector.load %arg6[%c0_123, %c0_124] : memref<8x1xf32, #tpu.memory_space<vmem>>, vector<8x1xf32>
    %264 = vector.broadcast %263 : vector<8x1xf32> to vector<8x256xf32>
    %265 = arith.mulf %262, %264 : vector<8x256xf32>
    %c0_125 = arith.constant 0 : index
    %c0_126 = arith.constant 0 : index
    %266 = vector.load %arg7[%c0_125, %c0_126] : memref<8x1xf32, #tpu.memory_space<vmem>>, vector<8x1xf32>
    %267 = vector.broadcast %266 : vector<8x1xf32> to vector<8x256xf32>
    %268 = arith.addf %265, %267 : vector<8x256xf32>
    %cst_127 = arith.constant 2.500000e-01 : f32
    %269 = vector.broadcast %cst_127 : f32 to vector<8x256xf32>
    %270 = arith.mulf %177, %269 : vector<8x256xf32>
    %271 = arith.addf %270, %268 : vector<8x256xf32>
    %cst_128 = arith.constant 5.000000e-01 : f32
    %272 = vector.broadcast %cst_128 : f32 to vector<8x256xf32>
    %273 = arith.cmpf ogt, %271, %272 : vector<8x256xf32>
    %274 = arith.extui %273 : vector<8x256xi1> to vector<8x256xi32>
    %275 = arith.sitofp %274 : vector<8x256xi32> to vector<8x256xf32>
    %cst_129 = arith.constant 1.000000e+00 : f32
    %276 = vector.broadcast %cst_129 : f32 to vector<8x256xf32>
    %277 = arith.subf %276, %275 : vector<8x256xf32>
    %278 = arith.mulf %271, %277 : vector<8x256xf32>
    %cst_130 = arith.constant 2.500000e-01 : f32
    %279 = vector.broadcast %cst_130 : f32 to vector<8x256xf32>
    %280 = arith.mulf %187, %279 : vector<8x256xf32>
    %281 = arith.addf %280, %238 : vector<8x256xf32>
    %cst_131 = arith.constant 5.000000e-01 : f32
    %282 = vector.broadcast %cst_131 : f32 to vector<8x256xf32>
    %283 = arith.cmpf ogt, %281, %282 : vector<8x256xf32>
    %284 = arith.extui %283 : vector<8x256xi1> to vector<8x256xi32>
    %285 = arith.sitofp %284 : vector<8x256xi32> to vector<8x256xf32>
    %cst_132 = arith.constant 1.000000e+00 : f32
    %286 = vector.broadcast %cst_132 : f32 to vector<8x256xf32>
    %287 = arith.subf %286, %285 : vector<8x256xf32>
    %288 = arith.mulf %281, %287 : vector<8x256xf32>
    %289 = arith.cmpf oeq, %285, %275 : vector<8x256xf32>
    %290 = arith.extui %289 : vector<8x256xi1> to vector<8x256xi32>
    %291 = arith.sitofp %290 : vector<8x256xi32> to vector<8x256xf32>
    %cst_133 = arith.constant dense<0.000000e+00> : vector<256xf32>
    %292 = vector.multi_reduction <add>, %291, %cst_133 [0] : vector<8x256xf32> to vector<256xf32>
    %293 = vector.shape_cast %292 : vector<256xf32> to vector<1x256xf32>
    %cst_134 = arith.constant 1.250000e-01 : f32
    %294 = vector.broadcast %cst_134 : f32 to vector<1x256xf32>
    %295 = arith.mulf %293, %294 : vector<1x256xf32>
    %cst_135 = arith.constant 1.000000e+00 : f32
    %296 = vector.broadcast %cst_135 : f32 to vector<1x256xf32>
    %297 = arith.subf %296, %295 : vector<1x256xf32>
    %298 = vector.broadcast %297 : vector<1x256xf32> to vector<4x256xf32>
    %299 = arith.mulf %298, %206 : vector<4x256xf32>
    %300 = vector.broadcast %295 : vector<1x256xf32> to vector<4x256xf32>
    %301 = arith.mulf %300, %239 : vector<4x256xf32>
    %302 = arith.addf %299, %301 : vector<4x256xf32>
    %c2_136 = arith.constant 2 : index
    %c0_137 = arith.constant 0 : index
    %c0_138 = arith.constant 0 : index
    %c0_139 = arith.constant 0 : index
    %303 = vector.load %arg11[%c2_136, %c0_137, %c0_138, %c0_139] : memref<4x1x4x256xf32, #tpu.memory_space<vmem>>, vector<1x1x4x256xf32>
    %304 = vector.shape_cast %303 : vector<1x1x4x256xf32> to vector<4x256xf32>
    %305 = vector.shape_cast %302 : vector<4x256xf32> to vector<1x1x4x256xf32>
    tpu.vector_store %arg11[%c2_136, %c0_137, %c0_138, %c0_139], %305 {strides = array<i32>} : memref<4x1x4x256xf32, #tpu.memory_space<vmem>>, vector<1x1x4x256xf32>,
    %c3_140 = arith.constant 3 : index
    %c0_141 = arith.constant 0 : index
    %c0_142 = arith.constant 0 : index
    %c0_143 = arith.constant 0 : index
    %306 = vector.load %arg2[%c3_140, %c0_141, %c0_142, %c0_143] : memref<4x1x4x256xf32, #tpu.memory_space<vmem>>, vector<1x1x4x256xf32>
    %307 = vector.shape_cast %306 : vector<1x1x4x256xf32> to vector<4x256xf32>
    %c3_144 = arith.constant 3 : index
    %c0_145 = arith.constant 0 : index
    %c0_146 = arith.constant 0 : index
    %c0_147 = arith.constant 0 : index
    %308 = vector.load %arg3[%c3_144, %c0_145, %c0_146, %c0_147] : memref<4x1x4x64xf32, #tpu.memory_space<vmem>>, vector<1x1x4x64xf32>
    %309 = vector.shape_cast %308 : vector<1x1x4x64xf32> to vector<4x64xf32>
    %c0_148 = arith.constant 0 : index
    %c0_149 = arith.constant 0 : index
    %310 = vector.load %arg8[%c0_148, %c0_149] : memref<8x4xf32, #tpu.memory_space<vmem>>, vector<8x1xf32>
    %311 = vector.extract_strided_slice %309 {offsets = [0, 0], sizes = [1, 64], strides = [1, 1]} : vector<4x64xf32> to vector<1x64xf32>
    %312 = vector.broadcast %310 : vector<8x1xf32> to vector<8x64xf32>
    %313 = vector.broadcast %311 : vector<1x64xf32> to vector<8x64xf32>
    %314 = arith.mulf %312, %313 : vector<8x64xf32>
    %c0_150 = arith.constant 0 : index
    %c1_151 = arith.constant 1 : index
    %315 = vector.load %arg8[%c0_150, %c1_151] : memref<8x4xf32, #tpu.memory_space<vmem>>, vector<8x1xf32>
    %316 = vector.extract_strided_slice %309 {offsets = [1, 0], sizes = [1, 64], strides = [1, 1]} : vector<4x64xf32> to vector<1x64xf32>
    %317 = vector.broadcast %315 : vector<8x1xf32> to vector<8x64xf32>
    %318 = vector.broadcast %316 : vector<1x64xf32> to vector<8x64xf32>
    %319 = arith.mulf %317, %318 : vector<8x64xf32>
    %320 = arith.addf %314, %319 : vector<8x64xf32>
    %c0_152 = arith.constant 0 : index
    %c2_153 = arith.constant 2 : index
    %321 = vector.load %arg8[%c0_152, %c2_153] : memref<8x4xf32, #tpu.memory_space<vmem>>, vector<8x1xf32>
    %322 = vector.extract_strided_slice %309 {offsets = [2, 0], sizes = [1, 64], strides = [1, 1]} : vector<4x64xf32> to vector<1x64xf32>
    %323 = vector.broadcast %321 : vector<8x1xf32> to vector<8x64xf32>
    %324 = vector.broadcast %322 : vector<1x64xf32> to vector<8x64xf32>
    %325 = arith.mulf %323, %324 : vector<8x64xf32>
    %326 = arith.addf %320, %325 : vector<8x64xf32>
    %c0_154 = arith.constant 0 : index
    %c3_155 = arith.constant 3 : index
    %327 = vector.load %arg8[%c0_154, %c3_155] : memref<8x4xf32, #tpu.memory_space<vmem>>, vector<8x1xf32>
    %328 = vector.extract_strided_slice %309 {offsets = [3, 0], sizes = [1, 64], strides = [1, 1]} : vector<4x64xf32> to vector<1x64xf32>
    %329 = vector.broadcast %327 : vector<8x1xf32> to vector<8x64xf32>
    %330 = vector.broadcast %328 : vector<1x64xf32> to vector<8x64xf32>
    %331 = arith.mulf %329, %330 : vector<8x64xf32>
    %332 = arith.addf %326, %331 : vector<8x64xf32>
    %c0_156 = arith.constant 0 : index
    %c0_157 = arith.constant 0 : index
    %333 = vector.load %arg9[%c0_156, %c0_157] : memref<8x1xf32, #tpu.memory_space<vmem>>, vector<8x1xf32>
    %334 = vector.broadcast %333 : vector<8x1xf32> to vector<8x64xf32>
    %335 = arith.mulf %332, %334 : vector<8x64xf32>
    %c0_158 = arith.constant 0 : index
    %c0_159 = arith.constant 0 : index
    %336 = vector.load %arg10[%c0_158, %c0_159] : memref<8x1xf32, #tpu.memory_space<vmem>>, vector<8x1xf32>
    %337 = vector.broadcast %336 : vector<8x1xf32> to vector<8x64xf32>
    %338 = arith.addf %335, %337 : vector<8x64xf32>
    %cst_160 = arith.constant dense<0.000000e+00> : vector<8x256xf32>
    %339 = tpu.matmul %338, %0, %cst_160 {dimension_numbers = #tpu.dot_dimension_numbers<[1], [0], [0], [1], [0, 0, 1, 1], [], []>} : vector<8x64xf32>, vector<64x256xf32>, vector<8x256xf32> -> vector<8x256xf32>
    %cst_161 = arith.constant dense<0.000000e+00> : vector<4x256xf32>
    %340 = tpu.matmul %309, %0, %cst_161 {dimension_numbers = #tpu.dot_dimension_numbers<[1], [0], [0], [1], [0, 0, 1, 1], [], []>} : vector<4x64xf32>, vector<64x256xf32>, vector<4x256xf32> -> vector<4x256xf32>
    %c0_162 = arith.constant 0 : index
    %c0_163 = arith.constant 0 : index
    %341 = vector.load %arg5[%c0_162, %c0_163] : memref<8x4xf32, #tpu.memory_space<vmem>>, vector<8x1xf32>
    %342 = vector.extract_strided_slice %307 {offsets = [0, 0], sizes = [1, 256], strides = [1, 1]} : vector<4x256xf32> to vector<1x256xf32>
    %343 = vector.broadcast %341 : vector<8x1xf32> to vector<8x256xf32>
    %344 = vector.broadcast %342 : vector<1x256xf32> to vector<8x256xf32>
    %345 = arith.mulf %343, %344 : vector<8x256xf32>
    %c0_164 = arith.constant 0 : index
    %c1_165 = arith.constant 1 : index
    %346 = vector.load %arg5[%c0_164, %c1_165] : memref<8x4xf32, #tpu.memory_space<vmem>>, vector<8x1xf32>
    %347 = vector.extract_strided_slice %307 {offsets = [1, 0], sizes = [1, 256], strides = [1, 1]} : vector<4x256xf32> to vector<1x256xf32>
    %348 = vector.broadcast %346 : vector<8x1xf32> to vector<8x256xf32>
    %349 = vector.broadcast %347 : vector<1x256xf32> to vector<8x256xf32>
    %350 = arith.mulf %348, %349 : vector<8x256xf32>
    %351 = arith.addf %345, %350 : vector<8x256xf32>
    %c0_166 = arith.constant 0 : index
    %c2_167 = arith.constant 2 : index
    %352 = vector.load %arg5[%c0_166, %c2_167] : memref<8x4xf32, #tpu.memory_space<vmem>>, vector<8x1xf32>
    %353 = vector.extract_strided_slice %307 {offsets = [2, 0], sizes = [1, 256], strides = [1, 1]} : vector<4x256xf32> to vector<1x256xf32>
    %354 = vector.broadcast %352 : vector<8x1xf32> to vector<8x256xf32>
    %355 = vector.broadcast %353 : vector<1x256xf32> to vector<8x256xf32>
    %356 = arith.mulf %354, %355 : vector<8x256xf32>
    %357 = arith.addf %351, %356 : vector<8x256xf32>
    %c0_168 = arith.constant 0 : index
    %c3_169 = arith.constant 3 : index
    %358 = vector.load %arg5[%c0_168, %c3_169] : memref<8x4xf32, #tpu.memory_space<vmem>>, vector<8x1xf32>
    %359 = vector.extract_strided_slice %307 {offsets = [3, 0], sizes = [1, 256], strides = [1, 1]} : vector<4x256xf32> to vector<1x256xf32>
    %360 = vector.broadcast %358 : vector<8x1xf32> to vector<8x256xf32>
    %361 = vector.broadcast %359 : vector<1x256xf32> to vector<8x256xf32>
    %362 = arith.mulf %360, %361 : vector<8x256xf32>
    %363 = arith.addf %357, %362 : vector<8x256xf32>
    %c0_170 = arith.constant 0 : index
    %c0_171 = arith.constant 0 : index
    %364 = vector.load %arg6[%c0_170, %c0_171] : memref<8x1xf32, #tpu.memory_space<vmem>>, vector<8x1xf32>
    %365 = vector.broadcast %364 : vector<8x1xf32> to vector<8x256xf32>
    %366 = arith.mulf %363, %365 : vector<8x256xf32>
    %c0_172 = arith.constant 0 : index
    %c0_173 = arith.constant 0 : index
    %367 = vector.load %arg7[%c0_172, %c0_173] : memref<8x1xf32, #tpu.memory_space<vmem>>, vector<8x1xf32>
    %368 = vector.broadcast %367 : vector<8x1xf32> to vector<8x256xf32>
    %369 = arith.addf %366, %368 : vector<8x256xf32>
    %cst_174 = arith.constant 2.500000e-01 : f32
    %370 = vector.broadcast %cst_174 : f32 to vector<8x256xf32>
    %371 = arith.mulf %278, %370 : vector<8x256xf32>
    %372 = arith.addf %371, %369 : vector<8x256xf32>
    %cst_175 = arith.constant 5.000000e-01 : f32
    %373 = vector.broadcast %cst_175 : f32 to vector<8x256xf32>
    %374 = arith.cmpf ogt, %372, %373 : vector<8x256xf32>
    %375 = arith.extui %374 : vector<8x256xi1> to vector<8x256xi32>
    %376 = arith.sitofp %375 : vector<8x256xi32> to vector<8x256xf32>
    %cst_176 = arith.constant 2.500000e-01 : f32
    %377 = vector.broadcast %cst_176 : f32 to vector<8x256xf32>
    %378 = arith.mulf %288, %377 : vector<8x256xf32>
    %379 = arith.addf %378, %339 : vector<8x256xf32>
    %cst_177 = arith.constant 5.000000e-01 : f32
    %380 = vector.broadcast %cst_177 : f32 to vector<8x256xf32>
    %381 = arith.cmpf ogt, %379, %380 : vector<8x256xf32>
    %382 = arith.extui %381 : vector<8x256xi1> to vector<8x256xi32>
    %383 = arith.sitofp %382 : vector<8x256xi32> to vector<8x256xf32>
    %384 = arith.cmpf oeq, %383, %376 : vector<8x256xf32>
    %385 = arith.extui %384 : vector<8x256xi1> to vector<8x256xi32>
    %386 = arith.sitofp %385 : vector<8x256xi32> to vector<8x256xf32>
    %cst_178 = arith.constant dense<0.000000e+00> : vector<256xf32>
    %387 = vector.multi_reduction <add>, %386, %cst_178 [0] : vector<8x256xf32> to vector<256xf32>
    %388 = vector.shape_cast %387 : vector<256xf32> to vector<1x256xf32>
    %cst_179 = arith.constant 1.250000e-01 : f32
    %389 = vector.broadcast %cst_179 : f32 to vector<1x256xf32>
    %390 = arith.mulf %388, %389 : vector<1x256xf32>
    %cst_180 = arith.constant 1.000000e+00 : f32
    %391 = vector.broadcast %cst_180 : f32 to vector<1x256xf32>
    %392 = arith.subf %391, %390 : vector<1x256xf32>
    %393 = vector.broadcast %392 : vector<1x256xf32> to vector<4x256xf32>
    %394 = arith.mulf %393, %307 : vector<4x256xf32>
    %395 = vector.broadcast %390 : vector<1x256xf32> to vector<4x256xf32>
    %396 = arith.mulf %395, %340 : vector<4x256xf32>
    %397 = arith.addf %394, %396 : vector<4x256xf32>
    %c3_181 = arith.constant 3 : index
    %c0_182 = arith.constant 0 : index
    %c0_183 = arith.constant 0 : index
    %c0_184 = arith.constant 0 : index
    %398 = vector.load %arg11[%c3_181, %c0_182, %c0_183, %c0_184] : memref<4x1x4x256xf32, #tpu.memory_space<vmem>>, vector<1x1x4x256xf32>
    %399 = vector.shape_cast %398 : vector<1x1x4x256xf32> to vector<4x256xf32>
    %400 = vector.shape_cast %397 : vector<4x256xf32> to vector<1x1x4x256xf32>
    tpu.vector_store %arg11[%c3_181, %c0_182, %c0_183, %c0_184], %400 {strides = array<i32>} : memref<4x1x4x256xf32, #tpu.memory_space<vmem>>, vector<1x1x4x256xf32>,
    return
  }
  func.func @transform_0(%arg0: i32, %arg1: i32) -> (i32, i32, i32, i32) {
    %c0_i32 = arith.constant 0 : i32
    %c0_i32_0 = arith.constant 0 : i32
    %c0_i32_1 = arith.constant 0 : i32
    return %c0_i32, %arg0, %c0_i32_0, %arg1 : i32, i32, i32, i32
  }
  func.func @transform_1(%arg0: i32, %arg1: i32) -> (i32, i32, i32, i32) {
    %c0_i32 = arith.constant 0 : i32
    %c0_i32_0 = arith.constant 0 : i32
    %c0_i32_1 = arith.constant 0 : i32
    %c0_i32_2 = arith.constant 0 : i32
    return %c0_i32, %arg0, %c0_i32_0, %c0_i32_1 : i32, i32, i32, i32
  }
  func.func @transform_2(%arg0: i32, %arg1: i32) -> (i32, i32) {
    %c0_i32 = arith.constant 0 : i32
    %c0_i32_0 = arith.constant 0 : i32
    return %c0_i32, %arg1 : i32, i32
  }
  func.func @transform_3(%arg0: i32, %arg1: i32) -> (i32, i32) {
    %c0_i32 = arith.constant 0 : i32
    %c0_i32_0 = arith.constant 0 : i32
    %c0_i32_1 = arith.constant 0 : i32
    return %c0_i32, %c0_i32_0 : i32, i32
  }
  func.func @transform_4(%arg0: i32, %arg1: i32) -> (i32, i32) {
    %c0_i32 = arith.constant 0 : i32
    %c0_i32_0 = arith.constant 0 : i32
    %c0_i32_1 = arith.constant 0 : i32
    return %c0_i32, %c0_i32_0 : i32, i32
  }
  func.func @transform_5(%arg0: i32, %arg1: i32) -> (i32, i32) {
    %c0_i32 = arith.constant 0 : i32
    %c0_i32_0 = arith.constant 0 : i32
    %c0_i32_1 = arith.constant 0 : i32
    return %c0_i32, %c0_i32_0 : i32, i32
  }
  func.func @transform_6(%arg0: i32, %arg1: i32) -> (i32, i32) {
    %c0_i32 = arith.constant 0 : i32
    %c0_i32_0 = arith.constant 0 : i32
    %c0_i32_1 = arith.constant 0 : i32
    return %c0_i32, %c0_i32_0 : i32, i32
  }
  func.func @transform_7(%arg0: i32, %arg1: i32) -> (i32, i32) {
    %c0_i32 = arith.constant 0 : i32
    %c0_i32_0 = arith.constant 0 : i32
    %c0_i32_1 = arith.constant 0 : i32
    return %c0_i32, %c0_i32_0 : i32, i32
  }
  func.func @transform_8(%arg0: i32, %arg1: i32) -> (i32, i32) {
    %c0_i32 = arith.constant 0 : i32
    %c0_i32_0 = arith.constant 0 : i32
    %c0_i32_1 = arith.constant 0 : i32
    return %c0_i32, %c0_i32_0 : i32, i32
  }
  func.func @transform_9(%arg0: i32, %arg1: i32) -> (i32, i32, i32, i32) {
    %c0_i32 = arith.constant 0 : i32
    %c0_i32_0 = arith.constant 0 : i32
    %c0_i32_1 = arith.constant 0 : i32
    return %c0_i32, %arg0, %c0_i32_0, %arg1 : i32, i32, i32, i32
  }
}

</mosaic_0001>

<llo_original>
// kernel: tpu_custom_call.1
$region0: #{tpu_custom_call.1}
  #allocation0 [shape = 'u32[]', space=smem, size = 0x4, offset = 0x4, fixed_abs, tag = 'smem constant byte address 0x4 - core index']
  #allocation1 [shape = 'u32[144,128]{1,0:T(1,128)}', space=vmem, size = 0x12000, scoped, tag = 'internal scratch']
  %s0 = inlined_call_operand.hbm [shape: f32[4,2,4,256], index: 0, kind: input, shape index: {}]
  %s1 = inlined_call_operand.vmem [shape: f32[4,2,4,64], index: 1, kind: input, shape index: {}]
  %s2 = inlined_call_operand.hbm [shape: f32[64,256], index: 2, kind: input, shape index: {}]
  %s3 = inlined_call_operand.vmem [shape: f32[8,4], index: 3, kind: input, shape index: {}]
  %s4 = inlined_call_operand.vmem [shape: f32[8,1], index: 4, kind: input, shape index: {}]
  %s5 = inlined_call_operand.vmem [shape: f32[8,1], index: 5, kind: input, shape index: {}]
  %s6 = inlined_call_operand.vmem [shape: f32[8,4], index: 6, kind: input, shape index: {}]
  %s7 = inlined_call_operand.vmem [shape: f32[8,1], index: 7, kind: input, shape index: {}]
  %s8 = inlined_call_operand.vmem [shape: f32[8,1], index: 8, kind: input, shape index: {}]
  %s9 = inlined_call_operand.hbm [shape: f32[4,2,4,256], index: 9, kind: output, shape index: {}]
  %s10 = sld [smem:[#allocation0]]
  $region118: #{tpu_custom_call.1} parent=0
    _
  %s12 = ssub.s32 1, %s10
  %s13 = scalar_select 0, %s12, %s10
  $region1: #{tpu_custom_call.1} parent=0
    #allocation2 [shape = 'u8[32768]{0}', space=vmem, size = 0x8000, scoped, tag = 'input window, operand 0']
    #allocation3 [shape = 's32[2]{0}', space=sflag, size = 0x8, scoped, tag = 'scoped memory for tpu_custom_call.1']
    #allocation4 [shape = 's32[2]{0}', space=sflag, size = 0x8, scoped, tag = 'scoped memory for tpu_custom_call.1']
    #allocation5 [shape = 'u8[16384]{0}', space=vmem, size = 0x4000, scoped, tag = 'input window, operand 1']
    #allocation6 [shape = 'u8[65536]{0}', space=vmem, size = 0x10000, scoped, tag = 'input window, operand 2, single buffered']
    #allocation7 [shape = 's32[1]{0}', space=sflag, size = 0x4, scoped, tag = 'scoped memory for tpu_custom_call.1']
    #allocation8 [shape = 'u8[32768]{0}', space=vmem, size = 0x8000, scoped, tag = 'output window, operand 0']
    %14 = vsyncpa [#allocation3], 0
    %s15 = scalar_lea.sflag [#allocation3], 1
    %16 = vsyncpa %s15, 0
    %17 = vsyncpa [#allocation7], 0
    %18 = vsyncpa [#allocation4], 0
    %s19 = scalar_lea.sflag [#allocation4], 1
    %20 = vsyncpa %s19, 0
    loop: start=0, step=1, limit=4
    $region2: #{tpu_custom_call.1} parent=1 // loop_pre_header
      _
    $region3: #{tpu_custom_call.1} parent=1 // loop_header
      %s22 = sphi 0, %s26
      %p23 = scmp.ge.s32.totalorder %s22, 4
      %s29 = sphi 0, %s41
      %s30 = sphi 0, %s37
      %s31 = sphi 0, %s29
      %s32 = sphi 0, %s30
      %s33 = sphi 0, %s31
      %s34 = sphi 0, %s32
      %s46 = sphi 0, %s48
      %s49 = sphi 0, %s46
      %s50 = sphi 0, %s49
      %s66 = sphi 0, %s50
      %s72 = sphi 0, %s74
      %s75 = sphi 0, %s72
      %s76 = sphi 0, %s75
      %s92 = sphi 0, %s76
      %s98 = sphi 0, %s100
      %s101 = sphi 0, %s98
      %s102 = sphi 0, %s101
      %s118 = sphi 0, %s102
      %s122 = sphi 0, %s122
      %s124 = sphi 0, %s122
      %s125 = sphi 0, %s124
      %s139 = sphi 0, %s125
      %s143 = sphi 0, %s143
      %s145 = sphi 0, %s143
      %s146 = sphi 0, %s145
      %s160 = sphi 0, %s146
      %s164 = sphi 0, %s164
      %s166 = sphi 0, %s164
      %s167 = sphi 0, %s166
      %s181 = sphi 0, %s167
      %s185 = sphi 0, %s185
      %s187 = sphi 0, %s185
      %s188 = sphi 0, %s187
      %s202 = sphi 0, %s188
      %s206 = sphi 0, %s206
      %s208 = sphi 0, %s206
      %s209 = sphi 0, %s208
      %s223 = sphi 0, %s209
      %s227 = sphi 0, %s227
      %s229 = sphi 0, %s227
      %s230 = sphi 0, %s229
      %s244 = sphi 0, %s230
      %s252 = sphi 0, %s254
      %s255 = sphi 0, %s252
      %s256 = sphi 0, %s255
      %s272 = sphi 0, %s256
    $region4: #{tpu_custom_call.1} parent=1 // loop_header_branch
      %25 = sbr.rel (%p23) target = $region8
    $region5: #{tpu_custom_call.1} parent=1 // loop_body
      %s27 = ssub.s32 %s22, 1
      %s28 = ssub.s32 %s22, 2
      %s35 = sadd.s32 1, %s30
      %p36 = scmp.ge.s32.totalorder %s35, 1
      %s37 = scalar_select %p36, 0, %s35
      %s38 = sadd.s32 1, %s29
      %s39 = scalar_select %p36, %s38, %s29
      %p40 = scmp.ge.s32.totalorder %s39, 2
      %s41 = scalar_select %p40, 0, %s39
      %s42 = ssub.s32 %s29, %s41
      %s43 = ssub.s32 %s30, %s37
      %s44 = sor.u32 %s42, %s43
      %p45 = scmp.eq.s32.totalorder %s44, 0
      %s47 = sadd.s32 %s46, 1
      %s48 = scalar_select %p45, %s46, %s47
      %p51 = pneg %p45
      %p52 = scmp.eq.s32.totalorder %s22, 1
      %p53 = por %p51, %p52
      %p54 = scmp.ne.s32.totalorder %s46, %s49
      %p55 = scmp.eq.s32.totalorder %s22, 0
      %p56 = por %p54, %p55
      %p57 = scmp.ne.s32.totalorder %s46, %s49
      %p58 = scmp.eq.s32.totalorder %s27, 1
      %p59 = por %p57, %p58
      %p60 = scmp.ne.s32.totalorder %s49, %s50
      %p61 = scmp.eq.s32.totalorder %s27, 0
      %p62 = por %p60, %p61
      %p63 = scmp.ne.s32.totalorder %s49, %s50
      %p64 = scmp.eq.s32.totalorder %s28, 1
      %p65 = por %p63, %p64
      %p67 = scmp.ne.s32.totalorder %s50, %s66
      %p68 = scmp.eq.s32.totalorder %s28, 0
      %p69 = por %p67, %p68
      %s70 = ssub.s32 %s29, %s41
      %p71 = scmp.eq.s32.totalorder %s70, 0
      %s73 = sadd.s32 %s72, 1
      %s74 = scalar_select %p71, %s72, %s73
      %p77 = pneg %p71
      %p78 = scmp.eq.s32.totalorder %s22, 1
      %p79 = por %p77, %p78
      %p80 = scmp.ne.s32.totalorder %s72, %s75
      %p81 = scmp.eq.s32.totalorder %s22, 0
      %p82 = por %p80, %p81
      %p83 = scmp.ne.s32.totalorder %s72, %s75
      %p84 = scmp.eq.s32.totalorder %s27, 1
      %p85 = por %p83, %p84
      %p86 = scmp.ne.s32.totalorder %s75, %s76
      %p87 = scmp.eq.s32.totalorder %s27, 0
      %p88 = por %p86, %p87
      %p89 = scmp.ne.s32.totalorder %s75, %s76
      %p90 = scmp.eq.s32.totalorder %s28, 1
      %p91 = por %p89, %p90
      %p93 = scmp.ne.s32.totalorder %s76, %s92
      %p94 = scmp.eq.s32.totalorder %s28, 0
      %p95 = por %p93, %p94
      %s96 = ssub.s32 %s30, %s37
      %p97 = scmp.eq.s32.totalorder %s96, 0
      %s99 = sadd.s32 %s98, 1
      %s100 = scalar_select %p97, %s98, %s99
      %p103 = pneg %p97
      %p104 = scmp.eq.s32.totalorder %s22, 1
      %p105 = por %p103, %p104
      %p106 = scmp.ne.s32.totalorder %s98, %s101
      %p107 = scmp.eq.s32.totalorder %s22, 0
      %p108 = por %p106, %p107
      %p109 = scmp.ne.s32.totalorder %s98, %s101
      %p110 = scmp.eq.s32.totalorder %s27, 1
      %p111 = por %p109, %p110
      %p112 = scmp.ne.s32.totalorder %s101, %s102
      %p113 = scmp.eq.s32.totalorder %s27, 0
      %p114 = por %p112, %p113
      %p115 = scmp.ne.s32.totalorder %s101, %s102
      %p116 = scmp.eq.s32.totalorder %s28, 1
      %p117 = por %p115, %p116
      %p119 = scmp.ne.s32.totalorder %s102, %s118
      %p120 = scmp.eq.s32.totalorder %s28, 0
      %p121 = por %p119, %p120
      %s123 = sadd.s32 %s122, 1
      %p126 = scmp.eq.s32.totalorder %s22, 1
      %p127 = scmp.ne.s32.totalorder %s122, %s124
      %p128 = scmp.eq.s32.totalorder %s22, 0
      %p129 = por %p127, %p128
      %p130 = scmp.ne.s32.totalorder %s122, %s124
      %p131 = scmp.eq.s32.totalorder %s27, 1
      %p132 = por %p130, %p131
      %p133 = scmp.ne.s32.totalorder %s124, %s125
      %p134 = scmp.eq.s32.totalorder %s27, 0
      %p135 = por %p133, %p134
      %p136 = scmp.ne.s32.totalorder %s124, %s125
      %p137 = scmp.eq.s32.totalorder %s28, 1
      %p138 = por %p136, %p137
      %p140 = scmp.ne.s32.totalorder %s125, %s139
      %p141 = scmp.eq.s32.totalorder %s28, 0
      %p142 = por %p140, %p141
      %s144 = sadd.s32 %s143, 1
      %p147 = scmp.eq.s32.totalorder %s22, 1
      %p148 = scmp.ne.s32.totalorder %s143, %s145
      %p149 = scmp.eq.s32.totalorder %s22, 0
      %p150 = por %p148, %p149
      %p151 = scmp.ne.s32.totalorder %s143, %s145
      %p152 = scmp.eq.s32.totalorder %s27, 1
      %p153 = por %p151, %p152
      %p154 = scmp.ne.s32.totalorder %s145, %s146
      %p155 = scmp.eq.s32.totalorder %s27, 0
      %p156 = por %p154, %p155
      %p157 = scmp.ne.s32.totalorder %s145, %s146
      %p158 = scmp.eq.s32.totalorder %s28, 1
      %p159 = por %p157, %p158
      %p161 = scmp.ne.s32.totalorder %s146, %s160
      %p162 = scmp.eq.s32.totalorder %s28, 0
      %p163 = por %p161, %p162
      %s165 = sadd.s32 %s164, 1
      %p168 = scmp.eq.s32.totalorder %s22, 1
      %p169 = scmp.ne.s32.totalorder %s164, %s166
      %p170 = scmp.eq.s32.totalorder %s22, 0
      %p171 = por %p169, %p170
      %p172 = scmp.ne.s32.totalorder %s164, %s166
      %p173 = scmp.eq.s32.totalorder %s27, 1
      %p174 = por %p172, %p173
      %p175 = scmp.ne.s32.totalorder %s166, %s167
      %p176 = scmp.eq.s32.totalorder %s27, 0
      %p177 = por %p175, %p176
      %p178 = scmp.ne.s32.totalorder %s166, %s167
      %p179 = scmp.eq.s32.totalorder %s28, 1
      %p180 = por %p178, %p179
      %p182 = scmp.ne.s32.totalorder %s167, %s181
      %p183 = scmp.eq.s32.totalorder %s28, 0
      %p184 = por %p182, %p183
      %s186 = sadd.s32 %s185, 1
      %p189 = scmp.eq.s32.totalorder %s22, 1
      %p190 = scmp.ne.s32.totalorder %s185, %s187
      %p191 = scmp.eq.s32.totalorder %s22, 0
      %p192 = por %p190, %p191
      %p193 = scmp.ne.s32.totalorder %s185, %s187
      %p194 = scmp.eq.s32.totalorder %s27, 1
      %p195 = por %p193, %p194
      %p196 = scmp.ne.s32.totalorder %s187, %s188
      %p197 = scmp.eq.s32.totalorder %s27, 0
      %p198 = por %p196, %p197
      %p199 = scmp.ne.s32.totalorder %s187, %s188
      %p200 = scmp.eq.s32.totalorder %s28, 1
      %p201 = por %p199, %p200
      %p203 = scmp.ne.s32.totalorder %s188, %s202
      %p204 = scmp.eq.s32.totalorder %s28, 0
      %p205 = por %p203, %p204
      %s207 = sadd.s32 %s206, 1
      %p210 = scmp.eq.s32.totalorder %s22, 1
      %p211 = scmp.ne.s32.totalorder %s206, %s208
      %p212 = scmp.eq.s32.totalorder %s22, 0
      %p213 = por %p211, %p212
      %p214 = scmp.ne.s32.totalorder %s206, %s208
      %p215 = scmp.eq.s32.totalorder %s27, 1
      %p216 = por %p214, %p215
      %p217 = scmp.ne.s32.totalorder %s208, %s209
      %p218 = scmp.eq.s32.totalorder %s27, 0
      %p219 = por %p217, %p218
      %p220 = scmp.ne.s32.totalorder %s208, %s209
      %p221 = scmp.eq.s32.totalorder %s28, 1
      %p222 = por %p220, %p221
      %p224 = scmp.ne.s32.totalorder %s209, %s223
      %p225 = scmp.eq.s32.totalorder %s28, 0
      %p226 = por %p224, %p225
      %s228 = sadd.s32 %s227, 1
      %p231 = scmp.eq.s32.totalorder %s22, 1
      %p232 = scmp.ne.s32.totalorder %s227, %s229
      %p233 = scmp.eq.s32.totalorder %s22, 0
      %p234 = por %p232, %p233
      %p235 = scmp.ne.s32.totalorder %s227, %s229
      %p236 = scmp.eq.s32.totalorder %s27, 1
      %p237 = por %p235, %p236
      %p238 = scmp.ne.s32.totalorder %s229, %s230
      %p239 = scmp.eq.s32.totalorder %s27, 0
      %p240 = por %p238, %p239
      %p241 = scmp.ne.s32.totalorder %s229, %s230
      %p242 = scmp.eq.s32.totalorder %s28, 1
      %p243 = por %p241, %p242
      %p245 = scmp.ne.s32.totalorder %s230, %s244
      %p246 = scmp.eq.s32.totalorder %s28, 0
      %p247 = por %p245, %p246
      %s248 = ssub.s32 %s29, %s41
      %s249 = ssub.s32 %s30, %s37
      %s250 = sor.u32 %s248, %s249
      %p251 = scmp.eq.s32.totalorder %s250, 0
      %s253 = sadd.s32 %s252, 1
      %s254 = scalar_select %p251, %s252, %s253
      %p257 = pneg %p251
      %p258 = scmp.eq.s32.totalorder %s22, 1
      %p259 = por %p257, %p258
      %p260 = scmp.ne.s32.totalorder %s252, %s255
      %p261 = scmp.eq.s32.totalorder %s22, 0
      %p262 = por %p260, %p261
      %p263 = scmp.ne.s32.totalorder %s252, %s255
      %p264 = scmp.eq.s32.totalorder %s27, 1
      %p265 = por %p263, %p264
      %p266 = scmp.ne.s32.totalorder %s255, %s256
      %p267 = scmp.eq.s32.totalorder %s27, 0
      %p268 = por %p266, %p267
      %p269 = scmp.ne.s32.totalorder %s255, %s256
      %p270 = scmp.eq.s32.totalorder %s28, 1
      %p271 = por %p269, %p270
      %p273 = scmp.ne.s32.totalorder %s256, %s272
      %p274 = scmp.eq.s32.totalorder %s28, 0
      %p275 = por %p273, %p274
      %p276 = scmp.le.s32.totalorder 1, %s22
      %p277 = scmp.lt.s32.totalorder %s22, 3
      %p278 = pnand %p276, %p277
      %p279 = pneg %p278
      // Predicated region
      $region9: #{tpu_custom_call.1} parent=5 // pred_check
        _
      $region10: #{tpu_custom_call.1} parent=5 // pred_check_branch
        %281 = sbr.rel (%p278) target = $region12
      $region11: #{tpu_custom_call.1} parent=5 // pred_region
        %s282 = ssub.s32 %s22, 1
        // Predicated region
        $region13: #{tpu_custom_call.1} parent=11 // pred_check
          %p283 = pneg %p114
        $region14: #{tpu_custom_call.1} parent=11 // pred_check_branch
          %285 = sbr.rel (%p283) target = $region16
        $region15: #{tpu_custom_call.1} parent=11 // pred_region
          %s286 = smul.u32 2, %s32
          %s288 = ssub.s32 2048, 2048
          %289 = vsyncadd [#allocation7], %s288
          %s290 = smul.addr %s286, 128
          %s291 = scalar_lea.hbm %s2, %s290
          %s292 = sshll.u32 [#allocation6], 4
          %s293 = int_to_ptr.vmem [resolvable:$true] %s292
          %298 = dma.hbm_to_vmem [thread:$0]  %s291, 2048, %s293, [#allocation7], 256, 256, 16
        $region16: #{tpu_custom_call.1} parent=11 // pred_fallthru
          _
        // Predicated region
        $region17: #{tpu_custom_call.1} parent=11 // pred_check
          %p299 = pneg %p135
        $region18: #{tpu_custom_call.1} parent=11 // pred_check_branch
          %301 = sbr.rel (%p299) target = $region20
        $region19: #{tpu_custom_call.1} parent=11 // pred_region
          _
        $region20: #{tpu_custom_call.1} parent=11 // pred_fallthru
          _
        // Predicated region
        $region21: #{tpu_custom_call.1} parent=11 // pred_check
          %p302 = pneg %p156
        $region22: #{tpu_custom_call.1} parent=11 // pred_check_branch
          %304 = sbr.rel (%p302) target = $region24
        $region23: #{tpu_custom_call.1} parent=11 // pred_region
          _
        $region24: #{tpu_custom_call.1} parent=11 // pred_fallthru
          _
        // Predicated region
        $region25: #{tpu_custom_call.1} parent=11 // pred_check
          %p305 = pneg %p177
        $region26: #{tpu_custom_call.1} parent=11 // pred_check_branch
          %307 = sbr.rel (%p305) target = $region28
        $region27: #{tpu_custom_call.1} parent=11 // pred_region
          _
        $region28: #{tpu_custom_call.1} parent=11 // pred_fallthru
          _
        // Predicated region
        $region29: #{tpu_custom_call.1} parent=11 // pred_check
          %p308 = pneg %p198
        $region30: #{tpu_custom_call.1} parent=11 // pred_check_branch
          %310 = sbr.rel (%p308) target = $region32
        $region31: #{tpu_custom_call.1} parent=11 // pred_region
          _
        $region32: #{tpu_custom_call.1} parent=11 // pred_fallthru
          _
        // Predicated region
        $region33: #{tpu_custom_call.1} parent=11 // pred_check
          %p311 = pneg %p219
        $region34: #{tpu_custom_call.1} parent=11 // pred_check_branch
          %313 = sbr.rel (%p311) target = $region36
        $region35: #{tpu_custom_call.1} parent=11 // pred_region
          _
        $region36: #{tpu_custom_call.1} parent=11 // pred_fallthru
          _
        // Predicated region
        $region37: #{tpu_custom_call.1} parent=11 // pred_check
          %p314 = pneg %p240
        $region38: #{tpu_custom_call.1} parent=11 // pred_check_branch
          %316 = sbr.rel (%p314) target = $region40
        $region39: #{tpu_custom_call.1} parent=11 // pred_region
          _
        $region40: #{tpu_custom_call.1} parent=11 // pred_fallthru
          _
      $region12: #{tpu_custom_call.1} parent=5 // pred_fallthru
        _
      %p317 = scmp.lt.s32.totalorder %s22, 2
      // Predicated region
      $region41: #{tpu_custom_call.1} parent=5 // pred_check
        %p318 = pneg %p317
      $region42: #{tpu_custom_call.1} parent=5 // pred_check_branch
        %320 = sbr.rel (%p318) target = $region44
      $region43: #{tpu_custom_call.1} parent=5 // pred_region
        // Predicated region
        $region45: #{tpu_custom_call.1} parent=43 // pred_check
          %p321 = pneg %p56
        $region46: #{tpu_custom_call.1} parent=43 // pred_check_branch
          %323 = sbr.rel (%p321) target = $region48
        $region47: #{tpu_custom_call.1} parent=43 // pred_region
          %s324 = sand.u32 %s46, 1
          %s325 = scalar_lea.sflag [#allocation3], %s324
          %s326 = sand.u32 %s46, 1
          %s327 = smul.addr %s326, 32
          %s328 = scalar_lea.vmem [#allocation2], %s327
          %s329 = smul.u32 2, %s30
          %s331 = ssub.s32 512, 512
          %332 = vsyncadd %s325, %s331
          %s333 = smul.addr %s29, 2
          %s334 = sadd.s32 %s329, %s333
          %s335 = smul.addr %s334, 64
          %s336 = scalar_lea.hbm %s0, %s335
          %s337 = sshll.u32 %s328, 4
          %s338 = int_to_ptr.vmem [resolvable:$true] %s337
          %343 = dma.hbm_to_vmem [thread:$0]  %s336, 512, %s338, %s325, 256, 128, 8
        $region48: #{tpu_custom_call.1} parent=43 // pred_fallthru
          _
        // Predicated region
        $region49: #{tpu_custom_call.1} parent=43 // pred_check
          %p344 = pneg %p82
        $region50: #{tpu_custom_call.1} parent=43 // pred_check_branch
          %346 = sbr.rel (%p344) target = $region52
        $region51: #{tpu_custom_call.1} parent=43 // pred_region
          %s347 = sand.u32 %s72, 1
          %s348 = sand.u32 %s72, 1
          %s349 = smul.addr %s348, 16
          %s350 = scalar_lea.vmem [#allocation5], %s349
          %s351 = smul.addr %s29, 4
          %s352 = scalar_lea.vmem %s1, %s351
          // Predicated region
          $region53: #{tpu_custom_call.1} parent=51 // pred_check
            _
          $region54: #{tpu_custom_call.1} parent=51 // pred_check_branch
            %354 = sbr.rel (0) target = $region56
          $region55: #{tpu_custom_call.1} parent=51 // pred_region
            // Predicated region
            $region57: #{tpu_custom_call.1} parent=55 // pred_check
              _
            $region58: #{tpu_custom_call.1} parent=55 // pred_check_branch
              %356 = sbr.rel target = $region60
            $region59: #{tpu_custom_call.1} parent=55 // pred_region
              // Predicated region
              $region72: #{tpu_custom_call.1} parent=59 // pred_check
                _
              $region73: #{tpu_custom_call.1} parent=59 // pred_check_branch
                %378 = sbr.rel (0) target = $region75
              $region74: #{tpu_custom_call.1} parent=59 // pred_region
                loop: start=0, step=1, limit=1
                $region76: #{tpu_custom_call.1} parent=74 // loop_pre_header
                  _
                $region77: #{tpu_custom_call.1} parent=74 // loop_header
                  %s380 = sphi 0, %s384
                  %p381 = scmp.ge.s32.totalorder %s380, 1
                  %s385 = sphi %s352, %s352
                  %s386 = sphi %s350, %s350
                $region78: #{tpu_custom_call.1} parent=74 // loop_header_branch
                  %383 = sbr.rel (%p381) target = $region82
                $region79: #{tpu_custom_call.1} parent=74 // loop_body
                  _
                $region80: #{tpu_custom_call.1} parent=74 // loop_footer
                  %s384 = sadd.s32 1, %s380
                $region81: #{tpu_custom_call.1} parent=74 // loop_footer_branch
                  %379 = sbr.rel target = $region77
                $region82: #{tpu_custom_call.1} parent=74 // loop_exit
                  _
                %s388 = ssub.s32 16, 1
                loop: start=0, step=1, limit=1
                $region83: #{tpu_custom_call.1} parent=74 // loop_pre_header
                  _
                $region84: #{tpu_custom_call.1} parent=74 // loop_header
                  %s390 = sphi 0, %s394
                  %p391 = scmp.ge.s32.totalorder %s390, 1
                  %s395 = sphi %s352, %s352
                  %s396 = sphi %s350, %s350
                $region85: #{tpu_custom_call.1} parent=74 // loop_header_branch
                  %393 = sbr.rel (%p391) target = $region89
                $region86: #{tpu_custom_call.1} parent=74 // loop_body
                  %v397 = vld [vmem:[%s395] sm:%s388]
                  %398 = vst [vmem:[%s396] sm:%s388] %v397
                  %v399 = vld [vmem:[%s395 + $0x8] sm:%s388]
                  %400 = vst [vmem:[%s396 + $0x4] sm:%s388] %v399
                  %v401 = vld [vmem:[%s395 + $0x10] sm:%s388]
                  %402 = vst [vmem:[%s396 + $0x8] sm:%s388] %v401
                  %v403 = vld [vmem:[%s395 + $0x18] sm:%s388]
                  %404 = vst [vmem:[%s396 + $0xc] sm:%s388] %v403
                $region87: #{tpu_custom_call.1} parent=74 // loop_footer
                  %s394 = sadd.s32 1, %s390
                $region88: #{tpu_custom_call.1} parent=74 // loop_footer_branch
                  %389 = sbr.rel target = $region84
                $region89: #{tpu_custom_call.1} parent=74 // loop_exit
                  _
              $region75: #{tpu_custom_call.1} parent=59 // pred_fallthru
                _
            $region60: #{tpu_custom_call.1} parent=55 // pred_fallthru
              _
            // Predicated region
            $region61: #{tpu_custom_call.1} parent=55 // pred_check
              _
            $region62: #{tpu_custom_call.1} parent=55 // pred_check_branch
              %358 = sbr.rel (0) target = $region64
            $region63: #{tpu_custom_call.1} parent=55 // pred_region
              %s360 = ssub.s32 16, 1
              loop: start=0, step=1, limit=1
              $region65: #{tpu_custom_call.1} parent=63 // loop_pre_header
                _
              $region66: #{tpu_custom_call.1} parent=63 // loop_header
                %s362 = sphi 0, %s366
                %p363 = scmp.ge.s32.totalorder %s362, 1
                %s367 = sphi %s352, %s352
                %s368 = sphi %s350, %s350
              $region67: #{tpu_custom_call.1} parent=63 // loop_header_branch
                %365 = sbr.rel (%p363) target = $region71
              $region68: #{tpu_custom_call.1} parent=63 // loop_body
                %v369 = vld [vmem:[%s367] sm:%s360]
                %370 = vst [vmem:[%s368] sm:%s360] %v369
                %v371 = vld [vmem:[%s367 + $0x8] sm:%s360]
                %372 = vst [vmem:[%s368 + $0x4] sm:%s360] %v371
                %v373 = vld [vmem:[%s367 + $0x10] sm:%s360]
                %374 = vst [vmem:[%s368 + $0x8] sm:%s360] %v373
                %v375 = vld [vmem:[%s367 + $0x18] sm:%s360]
                %376 = vst [vmem:[%s368 + $0xc] sm:%s360] %v375
              $region69: #{tpu_custom_call.1} parent=63 // loop_footer
                %s366 = sadd.s32 1, %s362
              $region70: #{tpu_custom_call.1} parent=63 // loop_footer_branch
                %361 = sbr.rel target = $region66
              $region71: #{tpu_custom_call.1} parent=63 // loop_exit
                _
            $region64: #{tpu_custom_call.1} parent=55 // pred_fallthru
              _
          $region56: #{tpu_custom_call.1} parent=51 // pred_fallthru
            _
          %405 = vnop
        $region52: #{tpu_custom_call.1} parent=43 // pred_fallthru
          _
      $region44: #{tpu_custom_call.1} parent=5 // pred_fallthru
        _
      %p406 = scmp.le.s32.totalorder 1, %s22
      %p407 = scmp.lt.s32.totalorder %s22, 3
      %p408 = pnand %p406, %p407
      %p409 = pneg %p408
      // Predicated region
      $region90: #{tpu_custom_call.1} parent=5 // pred_check
        _
      $region91: #{tpu_custom_call.1} parent=5 // pred_check_branch
        %411 = sbr.rel (%p408) target = $region93
      $region92: #{tpu_custom_call.1} parent=5 // pred_region
        %s412 = ssub.s32 %s22, 1
        %s413 = sand.u32 %s49, 1
        %s414 = scalar_lea.sflag [#allocation3], %s413
        %s415 = sand.u32 %s49, 1
        %s416 = smul.addr %s415, 32
        %s417 = scalar_lea.vmem [#allocation2], %s416
        // Predicated region
        $region94: #{tpu_custom_call.1} parent=92 // pred_check
          %p418 = pneg %p62
        $region95: #{tpu_custom_call.1} parent=92 // pred_check_branch
          %420 = sbr.rel (%p418) target = $region97
        $region96: #{tpu_custom_call.1} parent=92 // pred_region
          %421 = dma.done %s414, 512
        $region97: #{tpu_custom_call.1} parent=92 // pred_fallthru
          _
        %s422 = sand.u32 %s75, 1
        %s423 = sand.u32 %s75, 1
        %s424 = smul.addr %s423, 16
        %s425 = scalar_lea.vmem [#allocation5], %s424
        // Predicated region
        $region98: #{tpu_custom_call.1} parent=92 // pred_check
          %p426 = pneg %p88
        $region99: #{tpu_custom_call.1} parent=92 // pred_check_branch
          %428 = sbr.rel (%p426) target = $region101
        $region100: #{tpu_custom_call.1} parent=92 // pred_region
          _
        $region101: #{tpu_custom_call.1} parent=92 // pred_fallthru
          _
        // Predicated region
        $region102: #{tpu_custom_call.1} parent=92 // pred_check
          %p429 = pneg %p114
        $region103: #{tpu_custom_call.1} parent=92 // pred_check_branch
          %431 = sbr.rel (%p429) target = $region105
        $region104: #{tpu_custom_call.1} parent=92 // pred_region
          %432 = dma.done [#allocation7], 2048
        $region105: #{tpu_custom_call.1} parent=92 // pred_fallthru
          _
        %s433 = sand.u32 %s49, 1
        %s434 = scalar_lea.sflag [#allocation3], %s433
        %s435 = sand.u32 %s49, 1
        %s436 = smul.addr %s435, 32
        %s437 = scalar_lea.vmem [#allocation2], %s436
        %p438 = pneg %p62
        %p439 = pneg %p59
        %s440 = sand.u32 %s75, 1
        %s441 = sand.u32 %s75, 1
        %s442 = smul.addr %s441, 16
        %s443 = scalar_lea.vmem [#allocation5], %s442
        %p444 = pneg %p88
        %p445 = pneg %p85
        %p446 = pneg %p114
        %p447 = pneg %p111
        %p448 = pneg %p135
        %p449 = pneg %p132
        %p450 = pneg %p156
        %p451 = pneg %p153
        %p452 = pneg %p177
        %p453 = pneg %p174
        %p454 = pneg %p198
        %p455 = pneg %p195
        %p456 = pneg %p219
        %p457 = pneg %p216
        %p458 = pneg %p240
        %p459 = pneg %p237
        %p460 = pneg %p268
        %p461 = pneg %p265
        %s462 = sand.u32 %s255, 1
        %s463 = scalar_lea.sflag [#allocation4], %s462
        %s464 = sand.u32 %s255, 1
        %s465 = smul.addr %s464, 32
        %s466 = scalar_lea.vmem [#allocation8], %s465
        %s467 = smul.u32 2, %s32
        %s468 = smul.u32 2, %s32
        %s469 = smul.u32 2, %s32
        %v470 = vld [vmem:[#allocation6] sm:$0xff]
        %v471 = vld [vmem:[#allocation6 + $0x8] sm:$0xff]
        %v472 = vld [vmem:[#allocation6 + $0x10] sm:$0xff]
        %v473 = vld [vmem:[#allocation6 + $0x18] sm:$0xff]
        %v474 = vld [vmem:[#allocation6 + $0x20] sm:$0xff]
        %v475 = vld [vmem:[#allocation6 + $0x28] sm:$0xff]
        %v476 = vld [vmem:[#allocation6 + $0x30] sm:$0xff]
        %v477 = vld [vmem:[#allocation6 + $0x38] sm:$0xff]
        %v478 = vld [vmem:[#allocation6 + $0x40] sm:$0xff]
        %v479 = vld [vmem:[#allocation6 + $0x48] sm:$0xff]
        %v480 = vld [vmem:[#allocation6 + $0x50] sm:$0xff]
        %v481 = vld [vmem:[#allocation6 + $0x58] sm:$0xff]
        %v482 = vld [vmem:[#allocation6 + $0x60] sm:$0xff]
        %v483 = vld [vmem:[#allocation6 + $0x68] sm:$0xff]
        %v484 = vld [vmem:[#allocation6 + $0x70] sm:$0xff]
        %v485 = vld [vmem:[#allocation6 + $0x78] sm:$0xff]
        %v486 = vld [vmem:[%s417] sm:$0xff]
        %v487 = vld [vmem:[%s425] sm:$0xf]
        %v488 = vld [vmem:[%s6] sm:$0xff]
        %490 = vset.pattern.permute.xlu0 0
        %491 = vperm.xlu0 %490, %v488
        %v492 = vpop.permute.xlu0 %491
        %v494 = vlaneseq
        %v495 = vshrl.u32 %v494, 7
        %v496 = vsub.s32 0, %v495
        %v497 = vrot.slane %v487, %v496
        %v498 = vmul.f32 %v492, %v497
        %499 = vset.pattern.permute.xlu0 1
        %500 = vperm.xlu0 %499, %v488
        %v501 = vpop.permute.xlu0 %500
        %v503 = vlaneseq
        %v504 = vshrl.u32 %v503, 7
        %v505 = vsub.s32 1, %v504
        %v506 = vrot.slane %v487, %v505
        %v507 = vmul.f32 %v501, %v506
        %v508 = vadd.f32 %v498, %v507
        %509 = vset.pattern.permute.xlu0 2
        %510 = vperm.xlu0 %509, %v488
        %v511 = vpop.permute.xlu0 %510
        %v513 = vlaneseq
        %v514 = vshrl.u32 %v513, 7
        %v515 = vsub.s32 2, %v514
        %v516 = vrot.slane %v487, %v515
        %v517 = vmul.f32 %v511, %v516
        %v518 = vadd.f32 %v508, %v517
        %519 = vset.pattern.permute.xlu0 3
        %520 = vperm.xlu0 %519, %v488
        %v521 = vpop.permute.xlu0 %520
        %v523 = vlaneseq
        %v524 = vshrl.u32 %v523, 7
        %v525 = vsub.s32 3, %v524
        %v526 = vrot.slane %v487, %v525
        %v527 = vmul.f32 %v521, %v526
        %v528 = vadd.f32 %v518, %v527
        %v529 = vld [vmem:[%s7] sm:$0xff]
        %531 = vset.pattern.permute.xlu0 0
        %532 = vperm.xlu0 %531, %v529
        %v533 = vpop.permute.xlu0 %532
        %v535 = vmul.f32 %v528, %v533
        %v536 = vld [vmem:[%s8] sm:$0xff]
        %538 = vset.pattern.permute.xlu0 0
        %539 = vperm.xlu0 %538, %v536
        %v540 = vpop.permute.xlu0 %539
        %v542 = vadd.f32 %v535, %v540
        %vm543 = vcmask 523264
        %v545 = vsel %vm543, %v487, 0
        %547 = vmatprep.subr.mxu0 0.0
        %548 = vmatpush1.msra.mxu0 0.0
        %549 = vmatprep.subr.mxu0 0.0
        %550 = vmatpush1.msra.mxu0 0.0
        %551 = vmatprep.subr.mxu0 0.0
        %552 = vmatpush1.msra.mxu0 0.0
        %553 = vmatprep.subr.mxu0 0.0
        %554 = vmatpush1.msra.mxu0 0.0
        %555 = vmatprep.subr.mxu0 0.0
        %556 = vmatpush1.msra.mxu0 0.0
        %557 = vmatprep.subr.mxu0 0.0
        %558 = vmatpush1.msra.mxu0 0.0
        %559 = vmatprep.subr.mxu0 0.0
        %560 = vmatpush1.msra.mxu0 0.0
        %561 = vmatprep.subr.mxu0 0.0
        %562 = vmatpush1.msra.mxu0 0.0
        %563 = vmatprep.subr.mxu0 %v485
        %564 = vmatpush1.msra.mxu0 %v484
        %565 = vmatprep.subr.mxu0 %v483
        %566 = vmatpush1.msra.mxu0 %v482
        %567 = vmatprep.subr.mxu0 %v481
        %568 = vmatpush1.msra.mxu0 %v480
        %569 = vmatprep.subr.mxu0 %v479
        %570 = vmatpush1.msra.mxu0 %v478
        %571 = vmatprep.subr.mxu0 %v477
        %572 = vmatpush1.msra.mxu0 %v476
        %573 = vmatprep.subr.mxu0 %v475
        %574 = vmatpush1.msra.mxu0 %v474
        %575 = vmatprep.subr.mxu0 %v473
        %576 = vmatpush1.msra.mxu0 %v472
        %577 = vmatprep.subr.mxu0 %v471
        %578 = vmatpush1.msra.mxu0 %v470
        %579 = vmatprep.subr.mxu0 0.0
        %580 = vmatpush2.msra.mxu0 0.0
        %581 = vmatprep.subr.mxu0 0.0
        %582 = vmatpush2.msra.mxu0 0.0
        %583 = vmatprep.subr.mxu0 0.0
        %584 = vmatpush2.msra.mxu0 0.0
        %585 = vmatprep.subr.mxu0 0.0
        %586 = vmatpush2.msra.mxu0 0.0
        %587 = vmatprep.subr.mxu0 0.0
        %588 = vmatpush2.msra.mxu0 0.0
        %589 = vmatprep.subr.mxu0 0.0
        %590 = vmatpush2.msra.mxu0 0.0
        %591 = vmatprep.subr.mxu0 0.0
        %592 = vmatpush2.msra.mxu0 0.0
        %593 = vmatprep.subr.mxu0 0.0
        %594 = vmatpush2.msra.mxu0 0.0
        %595 = vmatprep.subr.mxu0 0.0
        %596 = vmatpush2.msra.mxu0 0.0
        %597 = vmatprep.subr.mxu0 0.0
        %598 = vmatpush2.msra.mxu0 0.0
        %599 = vmatprep.subr.mxu0 0.0
        %600 = vmatpush2.msra.mxu0 0.0
        %601 = vmatprep.subr.mxu0 0.0
        %602 = vmatpush2.msra.mxu0 0.0
        %603 = vmatprep.subr.mxu0 0.0
        %604 = vmatpush2.msra.mxu0 0.0
        %605 = vmatprep.subr.mxu0 0.0
        %606 = vmatpush2.msra.mxu0 0.0
        %607 = vmatprep.subr.mxu0 0.0
        %608 = vmatpush2.msra.mxu0 0.0
        %609 = vmatprep.subr.mxu0 0.0
        %610 = vmatpush2.msra.mxu0 0.0
        %611 = vmatprep.mubr.f32.mxu0 0.0
        %612 = vmatmul.mubr.f32.gmra.mxu0 %v545
        %v613 = vpop.f32.mrf.mxu0
        %v614 = vadd.f32 0.0, %v613
        %v615 = vpop.f32.mrf.mxu0
        %v616 = vadd.f32 0.0, %v615
        %617 = vdwg.mxu0
        %v618 = vld [vmem:[%s3] sm:$0xff]
        %620 = vset.pattern.permute.xlu0 0
        %621 = vperm.xlu0 %620, %v618
        %v622 = vpop.permute.xlu0 %621
        %v625 = vlaneseq
        %v626 = vshrl.u32 %v625, 7
        %v627 = vsub.s32 0, %v626
        %v628 = vrot.slane %v486, %v627
        %v629 = vlaneseq
        %v630 = vshrl.u32 %v629, 7
        %v631 = vsub.s32 4, %v630
        %v632 = vrot.slane %v486, %v631
        %v635 = vlaneseq
        %v636 = vshrl.u32 %v635, 7
        %v637 = vsub.s32 0, %v636
        %v638 = vrot.slane %v628, %v637
        %v639 = vlaneseq
        %v640 = vshrl.u32 %v639, 7
        %v641 = vsub.s32 0, %v640
        %v642 = vrot.slane %v632, %v641
        %v643 = vmul.f32 %v622, %v638
        %v644 = vmul.f32 %v622, %v642
        %645 = vset.pattern.permute.xlu0 1
        %646 = vperm.xlu0 %645, %v618
        %v647 = vpop.permute.xlu0 %646
        %v649 = vlaneseq
        %v650 = vshrl.u32 %v649, 7
        %v651 = vsub.s32 1, %v650
        %v652 = vrot.slane %v486, %v651
        %v653 = vlaneseq
        %v654 = vshrl.u32 %v653, 7
        %v655 = vsub.s32 5, %v654
        %v656 = vrot.slane %v486, %v655
        %v659 = vlaneseq
        %v660 = vshrl.u32 %v659, 7
        %v661 = vsub.s32 1, %v660
        %v662 = vrot.slane %v652, %v661
        %v663 = vlaneseq
        %v664 = vshrl.u32 %v663, 7
        %v665 = vsub.s32 1, %v664
        %v666 = vrot.slane %v656, %v665
        %v667 = vmul.f32 %v647, %v662
        %v668 = vmul.f32 %v647, %v666
        %v669 = vadd.f32 %v643, %v667
        %v670 = vadd.f32 %v644, %v668
        %671 = vset.pattern.permute.xlu0 2
        %672 = vperm.xlu0 %671, %v618
        %v673 = vpop.permute.xlu0 %672
        %v675 = vlaneseq
        %v676 = vshrl.u32 %v675, 7
        %v677 = vsub.s32 2, %v676
        %v678 = vrot.slane %v486, %v677
        %v679 = vlaneseq
        %v680 = vshrl.u32 %v679, 7
        %v681 = vsub.s32 6, %v680
        %v682 = vrot.slane %v486, %v681
        %v685 = vlaneseq
        %v686 = vshrl.u32 %v685, 7
        %v687 = vsub.s32 2, %v686
        %v688 = vrot.slane %v678, %v687
        %v689 = vlaneseq
        %v690 = vshrl.u32 %v689, 7
        %v691 = vsub.s32 2, %v690
        %v692 = vrot.slane %v682, %v691
        %v693 = vmul.f32 %v673, %v688
        %v694 = vmul.f32 %v673, %v692
        %v695 = vadd.f32 %v669, %v693
        %v696 = vadd.f32 %v670, %v694
        %697 = vset.pattern.permute.xlu0 3
        %698 = vperm.xlu0 %697, %v618
        %v699 = vpop.permute.xlu0 %698
        %v701 = vlaneseq
        %v702 = vshrl.u32 %v701, 7
        %v703 = vsub.s32 3, %v702
        %v704 = vrot.slane %v486, %v703
        %v705 = vlaneseq
        %v706 = vshrl.u32 %v705, 7
        %v707 = vsub.s32 7, %v706
        %v708 = vrot.slane %v486, %v707
        %v711 = vlaneseq
        %v712 = vshrl.u32 %v711, 7
        %v713 = vsub.s32 3, %v712
        %v714 = vrot.slane %v704, %v713
        %v715 = vlaneseq
        %v716 = vshrl.u32 %v715, 7
        %v717 = vsub.s32 3, %v716
        %v718 = vrot.slane %v708, %v717
        %v719 = vmul.f32 %v699, %v714
        %v720 = vmul.f32 %v699, %v718
        %v721 = vadd.f32 %v695, %v719
        %v722 = vadd.f32 %v696, %v720
        %v723 = vld [vmem:[%s4] sm:$0xff]
        %725 = vset.pattern.permute.xlu0 0
        %726 = vperm.xlu0 %725, %v723
        %v727 = vpop.permute.xlu0 %726
        %v729 = vmul.f32 %v721, %v727
        %v730 = vmul.f32 %v722, %v727
        %v731 = vld [vmem:[%s5] sm:$0xff]
        %733 = vset.pattern.permute.xlu0 0
        %734 = vperm.xlu0 %733, %v731
        %v735 = vpop.permute.xlu0 %734
        %v737 = vadd.f32 %v729, %v735
        %v738 = vadd.f32 %v730, %v735
        %v739 = vadd.f32 %v737, 0.0
        %v740 = vadd.f32 %v738, 0.0
        %vm741 = vcmp.gt.f32.partialorder %v739, 0.5
        %vm742 = vcmp.gt.f32.partialorder %v740, 0.5
        %v743 = vsel %vm741, 1, 0
        %v744 = vsel %vm742, 1, 0
        %v745 = vcvt.s32.f32 %v743
        %v746 = vcvt.s32.f32 %v744
        %v747 = vsub.f32 1.0, %v745
        %v748 = vsub.f32 1.0, %v746
        %v749 = vmul.f32 %v739, %v747
        %v750 = vmul.f32 %v740, %v748
        %v752 = vsel %vm543, %v542, 0
        %754 = vmatprep.subr.mxu0 0.0
        %755 = vmatpush1.msra.mxu0 0.0
        %756 = vmatprep.subr.mxu0 0.0
        %757 = vmatpush1.msra.mxu0 0.0
        %758 = vmatprep.subr.mxu0 0.0
        %759 = vmatpush1.msra.mxu0 0.0
        %760 = vmatprep.subr.mxu0 0.0
        %761 = vmatpush1.msra.mxu0 0.0
        %762 = vmatprep.subr.mxu0 0.0
        %763 = vmatpush1.msra.mxu0 0.0
        %764 = vmatprep.subr.mxu0 0.0
        %765 = vmatpush1.msra.mxu0 0.0
        %766 = vmatprep.subr.mxu0 0.0
        %767 = vmatpush1.msra.mxu0 0.0
        %768 = vmatprep.subr.mxu0 0.0
        %769 = vmatpush1.msra.mxu0 0.0
        %770 = vmatprep.subr.mxu0 %v485
        %771 = vmatpush1.msra.mxu0 %v484
        %772 = vmatprep.subr.mxu0 %v483
        %773 = vmatpush1.msra.mxu0 %v482
        %774 = vmatprep.subr.mxu0 %v481
        %775 = vmatpush1.msra.mxu0 %v480
        %776 = vmatprep.subr.mxu0 %v479
        %777 = vmatpush1.msra.mxu0 %v478
        %778 = vmatprep.subr.mxu0 %v477
        %779 = vmatpush1.msra.mxu0 %v476
        %780 = vmatprep.subr.mxu0 %v475
        %781 = vmatpush1.msra.mxu0 %v474
        %782 = vmatprep.subr.mxu0 %v473
        %783 = vmatpush1.msra.mxu0 %v472
        %784 = vmatprep.subr.mxu0 %v471
        %785 = vmatpush1.msra.mxu0 %v470
        %786 = vmatprep.subr.mxu0 0.0
        %787 = vmatpush2.msra.mxu0 0.0
        %788 = vmatprep.subr.mxu0 0.0
        %789 = vmatpush2.msra.mxu0 0.0
        %790 = vmatprep.subr.mxu0 0.0
        %791 = vmatpush2.msra.mxu0 0.0
        %792 = vmatprep.subr.mxu0 0.0
        %793 = vmatpush2.msra.mxu0 0.0
        %794 = vmatprep.subr.mxu0 0.0
        %795 = vmatpush2.msra.mxu0 0.0
        %796 = vmatprep.subr.mxu0 0.0
        %797 = vmatpush2.msra.mxu0 0.0
        %798 = vmatprep.subr.mxu0 0.0
        %799 = vmatpush2.msra.mxu0 0.0
        %800 = vmatprep.subr.mxu0 0.0
        %801 = vmatpush2.msra.mxu0 0.0
        %802 = vmatprep.subr.mxu0 0.0
        %803 = vmatpush2.msra.mxu0 0.0
        %804 = vmatprep.subr.mxu0 0.0
        %805 = vmatpush2.msra.mxu0 0.0
        %806 = vmatprep.subr.mxu0 0.0
        %807 = vmatpush2.msra.mxu0 0.0
        %808 = vmatprep.subr.mxu0 0.0
        %809 = vmatpush2.msra.mxu0 0.0
        %810 = vmatprep.subr.mxu0 0.0
        %811 = vmatpush2.msra.mxu0 0.0
        %812 = vmatprep.subr.mxu0 0.0
        %813 = vmatpush2.msra.mxu0 0.0
        %814 = vmatprep.subr.mxu0 0.0
        %815 = vmatpush2.msra.mxu0 0.0
        %816 = vmatprep.subr.mxu0 0.0
        %817 = vmatpush2.msra.mxu0 0.0
        %818 = vmatprep.mubr.f32.mxu0 0.0
        %819 = vmatmul.mubr.f32.gmra.mxu0 %v752
        %v820 = vpop.f32.mrf.mxu0
        %v821 = vadd.f32 0.0, %v820
        %v822 = vpop.f32.mrf.mxu0
        %v823 = vadd.f32 0.0, %v822
        %824 = vdwg.mxu0
        %vm825 = vcmp.gt.f32.partialorder %v821, 0.5
        %vm826 = vcmp.gt.f32.partialorder %v823, 0.5
        %v827 = vsel %vm825, 1, 0
        %v828 = vsel %vm826, 1, 0
        %v829 = vcvt.s32.f32 %v827
        %v830 = vcvt.s32.f32 %v828
        %v831 = vsub.f32 1.0, %v829
        %v832 = vsub.f32 1.0, %v830
        %v833 = vmul.f32 %v821, %v831
        %v834 = vmul.f32 %v823, %v832
        %vm835 = vcmp.eq.f32.partialorder %v829, %v745
        %vm836 = vcmp.eq.f32.partialorder %v830, %v746
        %v837 = vsel %vm835, 1, 0
        %v838 = vsel %vm836, 1, 0
        %v839 = vcvt.s32.f32 %v837
        %v840 = vcvt.s32.f32 %v838
        %v841 = vrot.slane %v839, 4
        %v842 = vadd.f32 %v839, %v841
        %v843 = vrot.slane %v842, 2
        %v844 = vadd.f32 %v842, %v843
        %v845 = vrot.slane %v844, 1
        %v846 = vadd.f32 %v844, %v845
        %v847 = vrot.slane %v840, 4
        %v848 = vadd.f32 %v840, %v847
        %v849 = vrot.slane %v848, 2
        %v850 = vadd.f32 %v848, %v849
        %v851 = vrot.slane %v850, 1
        %v852 = vadd.f32 %v850, %v851
        %v853 = vmul.f32 %v846, 0.125
        %v854 = vmul.f32 %v852, 0.125
        %v855 = vsub.f32 1.0, %v853
        %v856 = vsub.f32 1.0, %v854
        %v857 = vcombine.high %v486, %v486
        %v859 = vmul.f32 %v855, %v486
        %v860 = vmul.f32 %v856, %v857
        %v861 = vmul.f32 %v853, %v614
        %v862 = vmul.f32 %v854, %v616
        %v863 = vadd.f32 %v859, %v861
        %v864 = vadd.f32 %v860, %v862
        %v867 = vcombine.low %v863, %v864
        %869 = vst [vmem:[%s466] sm:$0xff] %v867
        %s870 = scalar_lea.vmem %s417, 8 [#allocation2]
        %v871 = vld [vmem:[%s870] sm:$0xff]
        %s872 = scalar_lea.vmem %s425, 4 [#allocation5]
        %v873 = vld [vmem:[%s872] sm:$0xf]
        %v874 = vld [vmem:[%s6] sm:$0xff]
        %876 = vset.pattern.permute.xlu0 0
        %877 = vperm.xlu0 %876, %v874
        %v878 = vpop.permute.xlu0 %877
        %v880 = vlaneseq
        %v881 = vshrl.u32 %v880, 7
        %v882 = vsub.s32 0, %v881
        %v883 = vrot.slane %v873, %v882
        %v884 = vmul.f32 %v878, %v883
        %885 = vset.pattern.permute.xlu0 1
        %886 = vperm.xlu0 %885, %v874
        %v887 = vpop.permute.xlu0 %886
        %v889 = vlaneseq
        %v890 = vshrl.u32 %v889, 7
        %v891 = vsub.s32 1, %v890
        %v892 = vrot.slane %v873, %v891
        %v893 = vmul.f32 %v887, %v892
        %v894 = vadd.f32 %v884, %v893
        %895 = vset.pattern.permute.xlu0 2
        %896 = vperm.xlu0 %895, %v874
        %v897 = vpop.permute.xlu0 %896
        %v899 = vlaneseq
        %v900 = vshrl.u32 %v899, 7
        %v901 = vsub.s32 2, %v900
        %v902 = vrot.slane %v873, %v901
        %v903 = vmul.f32 %v897, %v902
        %v904 = vadd.f32 %v894, %v903
        %905 = vset.pattern.permute.xlu0 3
        %906 = vperm.xlu0 %905, %v874
        %v907 = vpop.permute.xlu0 %906
        %v909 = vlaneseq
        %v910 = vshrl.u32 %v909, 7
        %v911 = vsub.s32 3, %v910
        %v912 = vrot.slane %v873, %v911
        %v913 = vmul.f32 %v907, %v912
        %v914 = vadd.f32 %v904, %v913
        %v915 = vld [vmem:[%s7] sm:$0xff]
        %917 = vset.pattern.permute.xlu0 0
        %918 = vperm.xlu0 %917, %v915
        %v919 = vpop.permute.xlu0 %918
        %v921 = vmul.f32 %v914, %v919
        %v922 = vld [vmem:[%s8] sm:$0xff]
        %924 = vset.pattern.permute.xlu0 0
        %925 = vperm.xlu0 %924, %v922
        %v926 = vpop.permute.xlu0 %925
        %v928 = vadd.f32 %v921, %v926
        %v930 = vsel %vm543, %v928, 0
        %932 = vmatprep.subr.mxu0 0.0
        %933 = vmatpush1.msra.mxu0 0.0
        %934 = vmatprep.subr.mxu0 0.0
        %935 = vmatpush1.msra.mxu0 0.0
        %936 = vmatprep.subr.mxu0 0.0
        %937 = vmatpush1.msra.mxu0 0.0
        %938 = vmatprep.subr.mxu0 0.0
        %939 = vmatpush1.msra.mxu0 0.0
        %940 = vmatprep.subr.mxu0 0.0
        %941 = vmatpush1.msra.mxu0 0.0
        %942 = vmatprep.subr.mxu0 0.0
        %943 = vmatpush1.msra.mxu0 0.0
        %944 = vmatprep.subr.mxu0 0.0
        %945 = vmatpush1.msra.mxu0 0.0
        %946 = vmatprep.subr.mxu0 0.0
        %947 = vmatpush1.msra.mxu0 0.0
        %948 = vmatprep.subr.mxu0 %v485
        %949 = vmatpush1.msra.mxu0 %v484
        %950 = vmatprep.subr.mxu0 %v483
        %951 = vmatpush1.msra.mxu0 %v482
        %952 = vmatprep.subr.mxu0 %v481
        %953 = vmatpush1.msra.mxu0 %v480
        %954 = vmatprep.subr.mxu0 %v479
        %955 = vmatpush1.msra.mxu0 %v478
        %956 = vmatprep.subr.mxu0 %v477
        %957 = vmatpush1.msra.mxu0 %v476
        %958 = vmatprep.subr.mxu0 %v475
        %959 = vmatpush1.msra.mxu0 %v474
        %960 = vmatprep.subr.mxu0 %v473
        %961 = vmatpush1.msra.mxu0 %v472
        %962 = vmatprep.subr.mxu0 %v471
        %963 = vmatpush1.msra.mxu0 %v470
        %964 = vmatprep.subr.mxu0 0.0
        %965 = vmatpush2.msra.mxu0 0.0
        %966 = vmatprep.subr.mxu0 0.0
        %967 = vmatpush2.msra.mxu0 0.0
        %968 = vmatprep.subr.mxu0 0.0
        %969 = vmatpush2.msra.mxu0 0.0
        %970 = vmatprep.subr.mxu0 0.0
        %971 = vmatpush2.msra.mxu0 0.0
        %972 = vmatprep.subr.mxu0 0.0
        %973 = vmatpush2.msra.mxu0 0.0
        %974 = vmatprep.subr.mxu0 0.0
        %975 = vmatpush2.msra.mxu0 0.0
        %976 = vmatprep.subr.mxu0 0.0
        %977 = vmatpush2.msra.mxu0 0.0
        %978 = vmatprep.subr.mxu0 0.0
        %979 = vmatpush2.msra.mxu0 0.0
        %980 = vmatprep.subr.mxu0 0.0
        %981 = vmatpush2.msra.mxu0 0.0
        %982 = vmatprep.subr.mxu0 0.0
        %983 = vmatpush2.msra.mxu0 0.0
        %984 = vmatprep.subr.mxu0 0.0
        %985 = vmatpush2.msra.mxu0 0.0
        %986 = vmatprep.subr.mxu0 0.0
        %987 = vmatpush2.msra.mxu0 0.0
        %988 = vmatprep.subr.mxu0 0.0
        %989 = vmatpush2.msra.mxu0 0.0
        %990 = vmatprep.subr.mxu0 0.0
        %991 = vmatpush2.msra.mxu0 0.0
        %992 = vmatprep.subr.mxu0 0.0
        %993 = vmatpush2.msra.mxu0 0.0
        %994 = vmatprep.subr.mxu0 0.0
        %995 = vmatpush2.msra.mxu0 0.0
        %996 = vmatprep.mubr.f32.mxu0 0.0
        %997 = vmatmul.mubr.f32.gmra.mxu0 %v930
        %v998 = vpop.f32.mrf.mxu0
        %v999 = vadd.f32 0.0, %v998
        %v1000 = vpop.f32.mrf.mxu0
        %v1001 = vadd.f32 0.0, %v1000
        %1002 = vdwg.mxu0
        %v1004 = vsel %vm543, %v873, 0
        %1006 = vmatprep.subr.mxu0 0.0
        %1007 = vmatpush1.msra.mxu0 0.0
        %1008 = vmatprep.subr.mxu0 0.0
        %1009 = vmatpush1.msra.mxu0 0.0
        %1010 = vmatprep.subr.mxu0 0.0
        %1011 = vmatpush1.msra.mxu0 0.0
        %1012 = vmatprep.subr.mxu0 0.0
        %1013 = vmatpush1.msra.mxu0 0.0
        %1014 = vmatprep.subr.mxu0 0.0
        %1015 = vmatpush1.msra.mxu0 0.0
        %1016 = vmatprep.subr.mxu0 0.0
        %1017 = vmatpush1.msra.mxu0 0.0
        %1018 = vmatprep.subr.mxu0 0.0
        %1019 = vmatpush1.msra.mxu0 0.0
        %1020 = vmatprep.subr.mxu0 0.0
        %1021 = vmatpush1.msra.mxu0 0.0
        %1022 = vmatprep.subr.mxu0 %v485
        %1023 = vmatpush1.msra.mxu0 %v484
        %1024 = vmatprep.subr.mxu0 %v483
        %1025 = vmatpush1.msra.mxu0 %v482
        %1026 = vmatprep.subr.mxu0 %v481
        %1027 = vmatpush1.msra.mxu0 %v480
        %1028 = vmatprep.subr.mxu0 %v479
        %1029 = vmatpush1.msra.mxu0 %v478
        %1030 = vmatprep.subr.mxu0 %v477
        %1031 = vmatpush1.msra.mxu0 %v476
        %1032 = vmatprep.subr.mxu0 %v475
        %1033 = vmatpush1.msra.mxu0 %v474
        %1034 = vmatprep.subr.mxu0 %v473
        %1035 = vmatpush1.msra.mxu0 %v472
        %1036 = vmatprep.subr.mxu0 %v471
        %1037 = vmatpush1.msra.mxu0 %v470
        %1038 = vmatprep.subr.mxu0 0.0
        %1039 = vmatpush2.msra.mxu0 0.0
        %1040 = vmatprep.subr.mxu0 0.0
        %1041 = vmatpush2.msra.mxu0 0.0
        %1042 = vmatprep.subr.mxu0 0.0
        %1043 = vmatpush2.msra.mxu0 0.0
        %1044 = vmatprep.subr.mxu0 0.0
        %1045 = vmatpush2.msra.mxu0 0.0
        %1046 = vmatprep.subr.mxu0 0.0
        %1047 = vmatpush2.msra.mxu0 0.0
        %1048 = vmatprep.subr.mxu0 0.0
        %1049 = vmatpush2.msra.mxu0 0.0
        %1050 = vmatprep.subr.mxu0 0.0
        %1051 = vmatpush2.msra.mxu0 0.0
        %1052 = vmatprep.subr.mxu0 0.0
        %1053 = vmatpush2.msra.mxu0 0.0
        %1054 = vmatprep.subr.mxu0 0.0
        %1055 = vmatpush2.msra.mxu0 0.0
        %1056 = vmatprep.subr.mxu0 0.0
        %1057 = vmatpush2.msra.mxu0 0.0
        %1058 = vmatprep.subr.mxu0 0.0
        %1059 = vmatpush2.msra.mxu0 0.0
        %1060 = vmatprep.subr.mxu0 0.0
        %1061 = vmatpush2.msra.mxu0 0.0
        %1062 = vmatprep.subr.mxu0 0.0
        %1063 = vmatpush2.msra.mxu0 0.0
        %1064 = vmatprep.subr.mxu0 0.0
        %1065 = vmatpush2.msra.mxu0 0.0
        %1066 = vmatprep.subr.mxu0 0.0
        %1067 = vmatpush2.msra.mxu0 0.0
        %1068 = vmatprep.subr.mxu0 0.0
        %1069 = vmatpush2.msra.mxu0 0.0
        %1070 = vmatprep.mubr.f32.mxu0 0.0
        %1071 = vmatmul.mubr.f32.gmra.mxu0 %v1004
        %v1072 = vpop.f32.mrf.mxu0
        %v1073 = vadd.f32 0.0, %v1072
        %v1074 = vpop.f32.mrf.mxu0
        %v1075 = vadd.f32 0.0, %v1074
        %1076 = vdwg.mxu0
        %v1077 = vld [vmem:[%s3] sm:$0xff]
        %1079 = vset.pattern.permute.xlu0 0
        %1080 = vperm.xlu0 %1079, %v1077
        %v1081 = vpop.permute.xlu0 %1080
        %v1084 = vlaneseq
        %v1085 = vshrl.u32 %v1084, 7
        %v1086 = vsub.s32 0, %v1085
        %v1087 = vrot.slane %v871, %v1086
        %v1088 = vlaneseq
        %v1089 = vshrl.u32 %v1088, 7
        %v1090 = vsub.s32 4, %v1089
        %v1091 = vrot.slane %v871, %v1090
        %v1094 = vlaneseq
        %v1095 = vshrl.u32 %v1094, 7
        %v1096 = vsub.s32 0, %v1095
        %v1097 = vrot.slane %v1087, %v1096
        %v1098 = vlaneseq
        %v1099 = vshrl.u32 %v1098, 7
        %v1100 = vsub.s32 0, %v1099
        %v1101 = vrot.slane %v1091, %v1100
        %v1102 = vmul.f32 %v1081, %v1097
        %v1103 = vmul.f32 %v1081, %v1101
        %1104 = vset.pattern.permute.xlu0 1
        %1105 = vperm.xlu0 %1104, %v1077
        %v1106 = vpop.permute.xlu0 %1105
        %v1108 = vlaneseq
        %v1109 = vshrl.u32 %v1108, 7
        %v1110 = vsub.s32 1, %v1109
        %v1111 = vrot.slane %v871, %v1110
        %v1112 = vlaneseq
        %v1113 = vshrl.u32 %v1112, 7
        %v1114 = vsub.s32 5, %v1113
        %v1115 = vrot.slane %v871, %v1114
        %v1118 = vlaneseq
        %v1119 = vshrl.u32 %v1118, 7
        %v1120 = vsub.s32 1, %v1119
        %v1121 = vrot.slane %v1111, %v1120
        %v1122 = vlaneseq
        %v1123 = vshrl.u32 %v1122, 7
        %v1124 = vsub.s32 1, %v1123
        %v1125 = vrot.slane %v1115, %v1124
        %v1126 = vmul.f32 %v1106, %v1121
        %v1127 = vmul.f32 %v1106, %v1125
        %v1128 = vadd.f32 %v1102, %v1126
        %v1129 = vadd.f32 %v1103, %v1127
        %1130 = vset.pattern.permute.xlu0 2
        %1131 = vperm.xlu0 %1130, %v1077
        %v1132 = vpop.permute.xlu0 %1131
        %v1134 = vlaneseq
        %v1135 = vshrl.u32 %v1134, 7
        %v1136 = vsub.s32 2, %v1135
        %v1137 = vrot.slane %v871, %v1136
        %v1138 = vlaneseq
        %v1139 = vshrl.u32 %v1138, 7
        %v1140 = vsub.s32 6, %v1139
        %v1141 = vrot.slane %v871, %v1140
        %v1144 = vlaneseq
        %v1145 = vshrl.u32 %v1144, 7
        %v1146 = vsub.s32 2, %v1145
        %v1147 = vrot.slane %v1137, %v1146
        %v1148 = vlaneseq
        %v1149 = vshrl.u32 %v1148, 7
        %v1150 = vsub.s32 2, %v1149
        %v1151 = vrot.slane %v1141, %v1150
        %v1152 = vmul.f32 %v1132, %v1147
        %v1153 = vmul.f32 %v1132, %v1151
        %v1154 = vadd.f32 %v1128, %v1152
        %v1155 = vadd.f32 %v1129, %v1153
        %1156 = vset.pattern.permute.xlu0 3
        %1157 = vperm.xlu0 %1156, %v1077
        %v1158 = vpop.permute.xlu0 %1157
        %v1160 = vlaneseq
        %v1161 = vshrl.u32 %v1160, 7
        %v1162 = vsub.s32 3, %v1161
        %v1163 = vrot.slane %v871, %v1162
        %v1164 = vlaneseq
        %v1165 = vshrl.u32 %v1164, 7
        %v1166 = vsub.s32 7, %v1165
        %v1167 = vrot.slane %v871, %v1166
        %v1170 = vlaneseq
        %v1171 = vshrl.u32 %v1170, 7
        %v1172 = vsub.s32 3, %v1171
        %v1173 = vrot.slane %v1163, %v1172
        %v1174 = vlaneseq
        %v1175 = vshrl.u32 %v1174, 7
        %v1176 = vsub.s32 3, %v1175
        %v1177 = vrot.slane %v1167, %v1176
        %v1178 = vmul.f32 %v1158, %v1173
        %v1179 = vmul.f32 %v1158, %v1177
        %v1180 = vadd.f32 %v1154, %v1178
        %v1181 = vadd.f32 %v1155, %v1179
        %v1182 = vld [vmem:[%s4] sm:$0xff]
        %1184 = vset.pattern.permute.xlu0 0
        %1185 = vperm.xlu0 %1184, %v1182
        %v1186 = vpop.permute.xlu0 %1185
        %v1188 = vmul.f32 %v1180, %v1186
        %v1189 = vmul.f32 %v1181, %v1186
        %v1190 = vld [vmem:[%s5] sm:$0xff]
        %1192 = vset.pattern.permute.xlu0 0
        %1193 = vperm.xlu0 %1192, %v1190
        %v1194 = vpop.permute.xlu0 %1193
        %v1196 = vadd.f32 %v1188, %v1194
        %v1197 = vadd.f32 %v1189, %v1194
        %v1198 = vmul.f32 %v749, 0.25
        %v1199 = vmul.f32 %v750, 0.25
        %v1200 = vadd.f32 %v1198, %v1196
        %v1201 = vadd.f32 %v1199, %v1197
        %vm1202 = vcmp.gt.f32.partialorder %v1200, 0.5
        %vm1203 = vcmp.gt.f32.partialorder %v1201, 0.5
        %v1204 = vsel %vm1202, 1, 0
        %v1205 = vsel %vm1203, 1, 0
        %v1206 = vcvt.s32.f32 %v1204
        %v1207 = vcvt.s32.f32 %v1205
        %v1208 = vsub.f32 1.0, %v1206
        %v1209 = vsub.f32 1.0, %v1207
        %v1210 = vmul.f32 %v1200, %v1208
        %v1211 = vmul.f32 %v1201, %v1209
        %v1212 = vmul.f32 %v833, 0.25
        %v1213 = vmul.f32 %v834, 0.25
        %v1214 = vadd.f32 %v1212, %v999
        %v1215 = vadd.f32 %v1213, %v1001
        %vm1216 = vcmp.gt.f32.partialorder %v1214, 0.5
        %vm1217 = vcmp.gt.f32.partialorder %v1215, 0.5
        %v1218 = vsel %vm1216, 1, 0
        %v1219 = vsel %vm1217, 1, 0
        %v1220 = vcvt.s32.f32 %v1218
        %v1221 = vcvt.s32.f32 %v1219
        %v1222 = vsub.f32 1.0, %v1220
        %v1223 = vsub.f32 1.0, %v1221
        %v1224 = vmul.f32 %v1214, %v1222
        %v1225 = vmul.f32 %v1215, %v1223
        %vm1226 = vcmp.eq.f32.partialorder %v1220, %v1206
        %vm1227 = vcmp.eq.f32.partialorder %v1221, %v1207
        %v1228 = vsel %vm1226, 1, 0
        %v1229 = vsel %vm1227, 1, 0
        %v1230 = vcvt.s32.f32 %v1228
        %v1231 = vcvt.s32.f32 %v1229
        %v1232 = vrot.slane %v1230, 4
        %v1233 = vadd.f32 %v1230, %v1232
        %v1234 = vrot.slane %v1233, 2
        %v1235 = vadd.f32 %v1233, %v1234
        %v1236 = vrot.slane %v1235, 1
        %v1237 = vadd.f32 %v1235, %v1236
        %v1238 = vrot.slane %v1231, 4
        %v1239 = vadd.f32 %v1231, %v1238
        %v1240 = vrot.slane %v1239, 2
        %v1241 = vadd.f32 %v1239, %v1240
        %v1242 = vrot.slane %v1241, 1
        %v1243 = vadd.f32 %v1241, %v1242
        %v1244 = vmul.f32 %v1237, 0.125
        %v1245 = vmul.f32 %v1243, 0.125
        %v1246 = vsub.f32 1.0, %v1244
        %v1247 = vsub.f32 1.0, %v1245
        %v1248 = vcombine.high %v871, %v871
        %v1250 = vmul.f32 %v1246, %v871
        %v1251 = vmul.f32 %v1247, %v1248
        %v1252 = vmul.f32 %v1244, %v1073
        %v1253 = vmul.f32 %v1245, %v1075
        %v1254 = vadd.f32 %v1250, %v1252
        %v1255 = vadd.f32 %v1251, %v1253
        %v1258 = vcombine.low %v1254, %v1255
        %s1260 = scalar_lea.vmem %s466, 8 [#allocation8]
        %1261 = vst [vmem:[%s1260] sm:$0xff] %v1258
        %s1262 = scalar_lea.vmem %s417, 16 [#allocation2]
        %v1263 = vld [vmem:[%s1262] sm:$0xff]
        %s1264 = scalar_lea.vmem %s425, 8 [#allocation5]
        %v1265 = vld [vmem:[%s1264] sm:$0xf]
        %v1266 = vld [vmem:[%s6] sm:$0xff]
        %1268 = vset.pattern.permute.xlu0 0
        %1269 = vperm.xlu0 %1268, %v1266
        %v1270 = vpop.permute.xlu0 %1269
        %v1272 = vlaneseq
        %v1273 = vshrl.u32 %v1272, 7
        %v1274 = vsub.s32 0, %v1273
        %v1275 = vrot.slane %v1265, %v1274
        %v1276 = vmul.f32 %v1270, %v1275
        %1277 = vset.pattern.permute.xlu0 1
        %1278 = vperm.xlu0 %1277, %v1266
        %v1279 = vpop.permute.xlu0 %1278
        %v1281 = vlaneseq
        %v1282 = vshrl.u32 %v1281, 7
        %v1283 = vsub.s32 1, %v1282
        %v1284 = vrot.slane %v1265, %v1283
        %v1285 = vmul.f32 %v1279, %v1284
        %v1286 = vadd.f32 %v1276, %v1285
        %1287 = vset.pattern.permute.xlu0 2
        %1288 = vperm.xlu0 %1287, %v1266
        %v1289 = vpop.permute.xlu0 %1288
        %v1291 = vlaneseq
        %v1292 = vshrl.u32 %v1291, 7
        %v1293 = vsub.s32 2, %v1292
        %v1294 = vrot.slane %v1265, %v1293
        %v1295 = vmul.f32 %v1289, %v1294
        %v1296 = vadd.f32 %v1286, %v1295
        %1297 = vset.pattern.permute.xlu0 3
        %1298 = vperm.xlu0 %1297, %v1266
        %v1299 = vpop.permute.xlu0 %1298
        %v1301 = vlaneseq
        %v1302 = vshrl.u32 %v1301, 7
        %v1303 = vsub.s32 3, %v1302
        %v1304 = vrot.slane %v1265, %v1303
        %v1305 = vmul.f32 %v1299, %v1304
        %v1306 = vadd.f32 %v1296, %v1305
        %v1307 = vld [vmem:[%s7] sm:$0xff]
        %1309 = vset.pattern.permute.xlu0 0
        %1310 = vperm.xlu0 %1309, %v1307
        %v1311 = vpop.permute.xlu0 %1310
        %v1313 = vmul.f32 %v1306, %v1311
        %v1314 = vld [vmem:[%s8] sm:$0xff]
        %1316 = vset.pattern.permute.xlu0 0
        %1317 = vperm.xlu0 %1316, %v1314
        %v1318 = vpop.permute.xlu0 %1317
        %v1320 = vadd.f32 %v1313, %v1318
        %v1322 = vsel %vm543, %v1320, 0
        %1324 = vmatprep.subr.mxu0 0.0
        %1325 = vmatpush1.msra.mxu0 0.0
        %1326 = vmatprep.subr.mxu0 0.0
        %1327 = vmatpush1.msra.mxu0 0.0
        %1328 = vmatprep.subr.mxu0 0.0
        %1329 = vmatpush1.msra.mxu0 0.0
        %1330 = vmatprep.subr.mxu0 0.0
        %1331 = vmatpush1.msra.mxu0 0.0
        %1332 = vmatprep.subr.mxu0 0.0
        %1333 = vmatpush1.msra.mxu0 0.0
        %1334 = vmatprep.subr.mxu0 0.0
        %1335 = vmatpush1.msra.mxu0 0.0
        %1336 = vmatprep.subr.mxu0 0.0
        %1337 = vmatpush1.msra.mxu0 0.0
        %1338 = vmatprep.subr.mxu0 0.0
        %1339 = vmatpush1.msra.mxu0 0.0
        %1340 = vmatprep.subr.mxu0 %v485
        %1341 = vmatpush1.msra.mxu0 %v484
        %1342 = vmatprep.subr.mxu0 %v483
        %1343 = vmatpush1.msra.mxu0 %v482
        %1344 = vmatprep.subr.mxu0 %v481
        %1345 = vmatpush1.msra.mxu0 %v480
        %1346 = vmatprep.subr.mxu0 %v479
        %1347 = vmatpush1.msra.mxu0 %v478
        %1348 = vmatprep.subr.mxu0 %v477
        %1349 = vmatpush1.msra.mxu0 %v476
        %1350 = vmatprep.subr.mxu0 %v475
        %1351 = vmatpush1.msra.mxu0 %v474
        %1352 = vmatprep.subr.mxu0 %v473
        %1353 = vmatpush1.msra.mxu0 %v472
        %1354 = vmatprep.subr.mxu0 %v471
        %1355 = vmatpush1.msra.mxu0 %v470
        %1356 = vmatprep.subr.mxu0 0.0
        %1357 = vmatpush2.msra.mxu0 0.0
        %1358 = vmatprep.subr.mxu0 0.0
        %1359 = vmatpush2.msra.mxu0 0.0
        %1360 = vmatprep.subr.mxu0 0.0
        %1361 = vmatpush2.msra.mxu0 0.0
        %1362 = vmatprep.subr.mxu0 0.0
        %1363 = vmatpush2.msra.mxu0 0.0
        %1364 = vmatprep.subr.mxu0 0.0
        %1365 = vmatpush2.msra.mxu0 0.0
        %1366 = vmatprep.subr.mxu0 0.0
        %1367 = vmatpush2.msra.mxu0 0.0
        %1368 = vmatprep.subr.mxu0 0.0
        %1369 = vmatpush2.msra.mxu0 0.0
        %1370 = vmatprep.subr.mxu0 0.0
        %1371 = vmatpush2.msra.mxu0 0.0
        %1372 = vmatprep.subr.mxu0 0.0
        %1373 = vmatpush2.msra.mxu0 0.0
        %1374 = vmatprep.subr.mxu0 0.0
        %1375 = vmatpush2.msra.mxu0 0.0
        %1376 = vmatprep.subr.mxu0 0.0
        %1377 = vmatpush2.msra.mxu0 0.0
        %1378 = vmatprep.subr.mxu0 0.0
        %1379 = vmatpush2.msra.mxu0 0.0
        %1380 = vmatprep.subr.mxu0 0.0
        %1381 = vmatpush2.msra.mxu0 0.0
        %1382 = vmatprep.subr.mxu0 0.0
        %1383 = vmatpush2.msra.mxu0 0.0
        %1384 = vmatprep.subr.mxu0 0.0
        %1385 = vmatpush2.msra.mxu0 0.0
        %1386 = vmatprep.subr.mxu0 0.0
        %1387 = vmatpush2.msra.mxu0 0.0
        %1388 = vmatprep.mubr.f32.mxu0 0.0
        %1389 = vmatmul.mubr.f32.gmra.mxu0 %v1322
        %v1390 = vpop.f32.mrf.mxu0
        %v1391 = vadd.f32 0.0, %v1390
        %v1392 = vpop.f32.mrf.mxu0
        %v1393 = vadd.f32 0.0, %v1392
        %1394 = vdwg.mxu0
        %v1396 = vsel %vm543, %v1265, 0
        %1398 = vmatprep.subr.mxu0 0.0
        %1399 = vmatpush1.msra.mxu0 0.0
        %1400 = vmatprep.subr.mxu0 0.0
        %1401 = vmatpush1.msra.mxu0 0.0
        %1402 = vmatprep.subr.mxu0 0.0
        %1403 = vmatpush1.msra.mxu0 0.0
        %1404 = vmatprep.subr.mxu0 0.0
        %1405 = vmatpush1.msra.mxu0 0.0
        %1406 = vmatprep.subr.mxu0 0.0
        %1407 = vmatpush1.msra.mxu0 0.0
        %1408 = vmatprep.subr.mxu0 0.0
        %1409 = vmatpush1.msra.mxu0 0.0
        %1410 = vmatprep.subr.mxu0 0.0
        %1411 = vmatpush1.msra.mxu0 0.0
        %1412 = vmatprep.subr.mxu0 0.0
        %1413 = vmatpush1.msra.mxu0 0.0
        %1414 = vmatprep.subr.mxu0 %v485
        %1415 = vmatpush1.msra.mxu0 %v484
        %1416 = vmatprep.subr.mxu0 %v483
        %1417 = vmatpush1.msra.mxu0 %v482
        %1418 = vmatprep.subr.mxu0 %v481
        %1419 = vmatpush1.msra.mxu0 %v480
        %1420 = vmatprep.subr.mxu0 %v479
        %1421 = vmatpush1.msra.mxu0 %v478
        %1422 = vmatprep.subr.mxu0 %v477
        %1423 = vmatpush1.msra.mxu0 %v476
        %1424 = vmatprep.subr.mxu0 %v475
        %1425 = vmatpush1.msra.mxu0 %v474
        %1426 = vmatprep.subr.mxu0 %v473
        %1427 = vmatpush1.msra.mxu0 %v472
        %1428 = vmatprep.subr.mxu0 %v471
        %1429 = vmatpush1.msra.mxu0 %v470
        %1430 = vmatprep.subr.mxu0 0.0
        %1431 = vmatpush2.msra.mxu0 0.0
        %1432 = vmatprep.subr.mxu0 0.0
        %1433 = vmatpush2.msra.mxu0 0.0
        %1434 = vmatprep.subr.mxu0 0.0
        %1435 = vmatpush2.msra.mxu0 0.0
        %1436 = vmatprep.subr.mxu0 0.0
        %1437 = vmatpush2.msra.mxu0 0.0
        %1438 = vmatprep.subr.mxu0 0.0
        %1439 = vmatpush2.msra.mxu0 0.0
        %1440 = vmatprep.subr.mxu0 0.0
        %1441 = vmatpush2.msra.mxu0 0.0
        %1442 = vmatprep.subr.mxu0 0.0
        %1443 = vmatpush2.msra.mxu0 0.0
        %1444 = vmatprep.subr.mxu0 0.0
        %1445 = vmatpush2.msra.mxu0 0.0
        %1446 = vmatprep.subr.mxu0 0.0
        %1447 = vmatpush2.msra.mxu0 0.0
        %1448 = vmatprep.subr.mxu0 0.0
        %1449 = vmatpush2.msra.mxu0 0.0
        %1450 = vmatprep.subr.mxu0 0.0
        %1451 = vmatpush2.msra.mxu0 0.0
        %1452 = vmatprep.subr.mxu0 0.0
        %1453 = vmatpush2.msra.mxu0 0.0
        %1454 = vmatprep.subr.mxu0 0.0
        %1455 = vmatpush2.msra.mxu0 0.0
        %1456 = vmatprep.subr.mxu0 0.0
        %1457 = vmatpush2.msra.mxu0 0.0
        %1458 = vmatprep.subr.mxu0 0.0
        %1459 = vmatpush2.msra.mxu0 0.0
        %1460 = vmatprep.subr.mxu0 0.0
        %1461 = vmatpush2.msra.mxu0 0.0
        %1462 = vmatprep.mubr.f32.mxu0 0.0
        %1463 = vmatmul.mubr.f32.gmra.mxu0 %v1396
        %v1464 = vpop.f32.mrf.mxu0
        %v1465 = vadd.f32 0.0, %v1464
        %v1466 = vpop.f32.mrf.mxu0
        %v1467 = vadd.f32 0.0, %v1466
        %1468 = vdwg.mxu0
        %v1469 = vld [vmem:[%s3] sm:$0xff]
        %1471 = vset.pattern.permute.xlu0 0
        %1472 = vperm.xlu0 %1471, %v1469
        %v1473 = vpop.permute.xlu0 %1472
        %v1476 = vlaneseq
        %v1477 = vshrl.u32 %v1476, 7
        %v1478 = vsub.s32 0, %v1477
        %v1479 = vrot.slane %v1263, %v1478
        %v1480 = vlaneseq
        %v1481 = vshrl.u32 %v1480, 7
        %v1482 = vsub.s32 4, %v1481
        %v1483 = vrot.slane %v1263, %v1482
        %v1486 = vlaneseq
        %v1487 = vshrl.u32 %v1486, 7
        %v1488 = vsub.s32 0, %v1487
        %v1489 = vrot.slane %v1479, %v1488
        %v1490 = vlaneseq
        %v1491 = vshrl.u32 %v1490, 7
        %v1492 = vsub.s32 0, %v1491
        %v1493 = vrot.slane %v1483, %v1492
        %v1494 = vmul.f32 %v1473, %v1489
        %v1495 = vmul.f32 %v1473, %v1493
        %1496 = vset.pattern.permute.xlu0 1
        %1497 = vperm.xlu0 %1496, %v1469
        %v1498 = vpop.permute.xlu0 %1497
        %v1500 = vlaneseq
        %v1501 = vshrl.u32 %v1500, 7
        %v1502 = vsub.s32 1, %v1501
        %v1503 = vrot.slane %v1263, %v1502
        %v1504 = vlaneseq
        %v1505 = vshrl.u32 %v1504, 7
        %v1506 = vsub.s32 5, %v1505
        %v1507 = vrot.slane %v1263, %v1506
        %v1510 = vlaneseq
        %v1511 = vshrl.u32 %v1510, 7
        %v1512 = vsub.s32 1, %v1511
        %v1513 = vrot.slane %v1503, %v1512
        %v1514 = vlaneseq
        %v1515 = vshrl.u32 %v1514, 7
        %v1516 = vsub.s32 1, %v1515
        %v1517 = vrot.slane %v1507, %v1516
        %v1518 = vmul.f32 %v1498, %v1513
        %v1519 = vmul.f32 %v1498, %v1517
        %v1520 = vadd.f32 %v1494, %v1518
        %v1521 = vadd.f32 %v1495, %v1519
        %1522 = vset.pattern.permute.xlu0 2
        %1523 = vperm.xlu0 %1522, %v1469
        %v1524 = vpop.permute.xlu0 %1523
        %v1526 = vlaneseq
        %v1527 = vshrl.u32 %v1526, 7
        %v1528 = vsub.s32 2, %v1527
        %v1529 = vrot.slane %v1263, %v1528
        %v1530 = vlaneseq
        %v1531 = vshrl.u32 %v1530, 7
        %v1532 = vsub.s32 6, %v1531
        %v1533 = vrot.slane %v1263, %v1532
        %v1536 = vlaneseq
        %v1537 = vshrl.u32 %v1536, 7
        %v1538 = vsub.s32 2, %v1537
        %v1539 = vrot.slane %v1529, %v1538
        %v1540 = vlaneseq
        %v1541 = vshrl.u32 %v1540, 7
        %v1542 = vsub.s32 2, %v1541
        %v1543 = vrot.slane %v1533, %v1542
        %v1544 = vmul.f32 %v1524, %v1539
        %v1545 = vmul.f32 %v1524, %v1543
        %v1546 = vadd.f32 %v1520, %v1544
        %v1547 = vadd.f32 %v1521, %v1545
        %1548 = vset.pattern.permute.xlu0 3
        %1549 = vperm.xlu0 %1548, %v1469
        %v1550 = vpop.permute.xlu0 %1549
        %v1552 = vlaneseq
        %v1553 = vshrl.u32 %v1552, 7
        %v1554 = vsub.s32 3, %v1553
        %v1555 = vrot.slane %v1263, %v1554
        %v1556 = vlaneseq
        %v1557 = vshrl.u32 %v1556, 7
        %v1558 = vsub.s32 7, %v1557
        %v1559 = vrot.slane %v1263, %v1558
        %v1562 = vlaneseq
        %v1563 = vshrl.u32 %v1562, 7
        %v1564 = vsub.s32 3, %v1563
        %v1565 = vrot.slane %v1555, %v1564
        %v1566 = vlaneseq
        %v1567 = vshrl.u32 %v1566, 7
        %v1568 = vsub.s32 3, %v1567
        %v1569 = vrot.slane %v1559, %v1568
        %v1570 = vmul.f32 %v1550, %v1565
        %v1571 = vmul.f32 %v1550, %v1569
        %v1572 = vadd.f32 %v1546, %v1570
        %v1573 = vadd.f32 %v1547, %v1571
        %v1574 = vld [vmem:[%s4] sm:$0xff]
        %1576 = vset.pattern.permute.xlu0 0
        %1577 = vperm.xlu0 %1576, %v1574
        %v1578 = vpop.permute.xlu0 %1577
        %v1580 = vmul.f32 %v1572, %v1578
        %v1581 = vmul.f32 %v1573, %v1578
        %v1582 = vld [vmem:[%s5] sm:$0xff]
        %1584 = vset.pattern.permute.xlu0 0
        %1585 = vperm.xlu0 %1584, %v1582
        %v1586 = vpop.permute.xlu0 %1585
        %v1588 = vadd.f32 %v1580, %v1586
        %v1589 = vadd.f32 %v1581, %v1586
        %v1590 = vmul.f32 %v1210, 0.25
        %v1591 = vmul.f32 %v1211, 0.25
        %v1592 = vadd.f32 %v1590, %v1588
        %v1593 = vadd.f32 %v1591, %v1589
        %vm1594 = vcmp.gt.f32.partialorder %v1592, 0.5
        %vm1595 = vcmp.gt.f32.partialorder %v1593, 0.5
        %v1596 = vsel %vm1594, 1, 0
        %v1597 = vsel %vm1595, 1, 0
        %v1598 = vcvt.s32.f32 %v1596
        %v1599 = vcvt.s32.f32 %v1597
        %v1600 = vsub.f32 1.0, %v1598
        %v1601 = vsub.f32 1.0, %v1599
        %v1602 = vmul.f32 %v1592, %v1600
        %v1603 = vmul.f32 %v1593, %v1601
        %v1604 = vmul.f32 %v1224, 0.25
        %v1605 = vmul.f32 %v1225, 0.25
        %v1606 = vadd.f32 %v1604, %v1391
        %v1607 = vadd.f32 %v1605, %v1393
        %vm1608 = vcmp.gt.f32.partialorder %v1606, 0.5
        %vm1609 = vcmp.gt.f32.partialorder %v1607, 0.5
        %v1610 = vsel %vm1608, 1, 0
        %v1611 = vsel %vm1609, 1, 0
        %v1612 = vcvt.s32.f32 %v1610
        %v1613 = vcvt.s32.f32 %v1611
        %v1614 = vsub.f32 1.0, %v1612
        %v1615 = vsub.f32 1.0, %v1613
        %v1616 = vmul.f32 %v1606, %v1614
        %v1617 = vmul.f32 %v1607, %v1615
        %vm1618 = vcmp.eq.f32.partialorder %v1612, %v1598
        %vm1619 = vcmp.eq.f32.partialorder %v1613, %v1599
        %v1620 = vsel %vm1618, 1, 0
        %v1621 = vsel %vm1619, 1, 0
        %v1622 = vcvt.s32.f32 %v1620
        %v1623 = vcvt.s32.f32 %v1621
        %v1624 = vrot.slane %v1622, 4
        %v1625 = vadd.f32 %v1622, %v1624
        %v1626 = vrot.slane %v1625, 2
        %v1627 = vadd.f32 %v1625, %v1626
        %v1628 = vrot.slane %v1627, 1
        %v1629 = vadd.f32 %v1627, %v1628
        %v1630 = vrot.slane %v1623, 4
        %v1631 = vadd.f32 %v1623, %v1630
        %v1632 = vrot.slane %v1631, 2
        %v1633 = vadd.f32 %v1631, %v1632
        %v1634 = vrot.slane %v1633, 1
        %v1635 = vadd.f32 %v1633, %v1634
        %v1636 = vmul.f32 %v1629, 0.125
        %v1637 = vmul.f32 %v1635, 0.125
        %v1638 = vsub.f32 1.0, %v1636
        %v1639 = vsub.f32 1.0, %v1637
        %v1640 = vcombine.high %v1263, %v1263
        %v1642 = vmul.f32 %v1638, %v1263
        %v1643 = vmul.f32 %v1639, %v1640
        %v1644 = vmul.f32 %v1636, %v1465
        %v1645 = vmul.f32 %v1637, %v1467
        %v1646 = vadd.f32 %v1642, %v1644
        %v1647 = vadd.f32 %v1643, %v1645
        %v1650 = vcombine.low %v1646, %v1647
        %s1652 = scalar_lea.vmem %s466, 16 [#allocation8]
        %1653 = vst [vmem:[%s1652] sm:$0xff] %v1650
        %s1654 = scalar_lea.vmem %s417, 24 [#allocation2]
        %v1655 = vld [vmem:[%s1654] sm:$0xff]
        %s1656 = scalar_lea.vmem %s425, 12 [#allocation5]
        %v1657 = vld [vmem:[%s1656] sm:$0xf]
        %v1658 = vld [vmem:[%s6] sm:$0xff]
        %1660 = vset.pattern.permute.xlu0 0
        %1661 = vperm.xlu0 %1660, %v1658
        %v1662 = vpop.permute.xlu0 %1661
        %v1664 = vlaneseq
        %v1665 = vshrl.u32 %v1664, 7
        %v1666 = vsub.s32 0, %v1665
        %v1667 = vrot.slane %v1657, %v1666
        %v1668 = vmul.f32 %v1662, %v1667
        %1669 = vset.pattern.permute.xlu0 1
        %1670 = vperm.xlu0 %1669, %v1658
        %v1671 = vpop.permute.xlu0 %1670
        %v1673 = vlaneseq
        %v1674 = vshrl.u32 %v1673, 7
        %v1675 = vsub.s32 1, %v1674
        %v1676 = vrot.slane %v1657, %v1675
        %v1677 = vmul.f32 %v1671, %v1676
        %v1678 = vadd.f32 %v1668, %v1677
        %1679 = vset.pattern.permute.xlu0 2
        %1680 = vperm.xlu0 %1679, %v1658
        %v1681 = vpop.permute.xlu0 %1680
        %v1683 = vlaneseq
        %v1684 = vshrl.u32 %v1683, 7
        %v1685 = vsub.s32 2, %v1684
        %v1686 = vrot.slane %v1657, %v1685
        %v1687 = vmul.f32 %v1681, %v1686
        %v1688 = vadd.f32 %v1678, %v1687
        %1689 = vset.pattern.permute.xlu0 3
        %1690 = vperm.xlu0 %1689, %v1658
        %v1691 = vpop.permute.xlu0 %1690
        %v1693 = vlaneseq
        %v1694 = vshrl.u32 %v1693, 7
        %v1695 = vsub.s32 3, %v1694
        %v1696 = vrot.slane %v1657, %v1695
        %v1697 = vmul.f32 %v1691, %v1696
        %v1698 = vadd.f32 %v1688, %v1697
        %v1699 = vld [vmem:[%s7] sm:$0xff]
        %1701 = vset.pattern.permute.xlu0 0
        %1702 = vperm.xlu0 %1701, %v1699
        %v1703 = vpop.permute.xlu0 %1702
        %v1705 = vmul.f32 %v1698, %v1703
        %v1706 = vld [vmem:[%s8] sm:$0xff]
        %1708 = vset.pattern.permute.xlu0 0
        %1709 = vperm.xlu0 %1708, %v1706
        %v1710 = vpop.permute.xlu0 %1709
        %v1712 = vadd.f32 %v1705, %v1710
        %v1714 = vsel %vm543, %v1712, 0
        %1716 = vmatprep.subr.mxu0 0.0
        %1717 = vmatpush1.msra.mxu0 0.0
        %1718 = vmatprep.subr.mxu0 0.0
        %1719 = vmatpush1.msra.mxu0 0.0
        %1720 = vmatprep.subr.mxu0 0.0
        %1721 = vmatpush1.msra.mxu0 0.0
        %1722 = vmatprep.subr.mxu0 0.0
        %1723 = vmatpush1.msra.mxu0 0.0
        %1724 = vmatprep.subr.mxu0 0.0
        %1725 = vmatpush1.msra.mxu0 0.0
        %1726 = vmatprep.subr.mxu0 0.0
        %1727 = vmatpush1.msra.mxu0 0.0
        %1728 = vmatprep.subr.mxu0 0.0
        %1729 = vmatpush1.msra.mxu0 0.0
        %1730 = vmatprep.subr.mxu0 0.0
        %1731 = vmatpush1.msra.mxu0 0.0
        %1732 = vmatprep.subr.mxu0 %v485
        %1733 = vmatpush1.msra.mxu0 %v484
        %1734 = vmatprep.subr.mxu0 %v483
        %1735 = vmatpush1.msra.mxu0 %v482
        %1736 = vmatprep.subr.mxu0 %v481
        %1737 = vmatpush1.msra.mxu0 %v480
        %1738 = vmatprep.subr.mxu0 %v479
        %1739 = vmatpush1.msra.mxu0 %v478
        %1740 = vmatprep.subr.mxu0 %v477
        %1741 = vmatpush1.msra.mxu0 %v476
        %1742 = vmatprep.subr.mxu0 %v475
        %1743 = vmatpush1.msra.mxu0 %v474
        %1744 = vmatprep.subr.mxu0 %v473
        %1745 = vmatpush1.msra.mxu0 %v472
        %1746 = vmatprep.subr.mxu0 %v471
        %1747 = vmatpush1.msra.mxu0 %v470
        %1748 = vmatprep.subr.mxu0 0.0
        %1749 = vmatpush2.msra.mxu0 0.0
        %1750 = vmatprep.subr.mxu0 0.0
        %1751 = vmatpush2.msra.mxu0 0.0
        %1752 = vmatprep.subr.mxu0 0.0
        %1753 = vmatpush2.msra.mxu0 0.0
        %1754 = vmatprep.subr.mxu0 0.0
        %1755 = vmatpush2.msra.mxu0 0.0
        %1756 = vmatprep.subr.mxu0 0.0
        %1757 = vmatpush2.msra.mxu0 0.0
        %1758 = vmatprep.subr.mxu0 0.0
        %1759 = vmatpush2.msra.mxu0 0.0
        %1760 = vmatprep.subr.mxu0 0.0
        %1761 = vmatpush2.msra.mxu0 0.0
        %1762 = vmatprep.subr.mxu0 0.0
        %1763 = vmatpush2.msra.mxu0 0.0
        %1764 = vmatprep.subr.mxu0 0.0
        %1765 = vmatpush2.msra.mxu0 0.0
        %1766 = vmatprep.subr.mxu0 0.0
        %1767 = vmatpush2.msra.mxu0 0.0
        %1768 = vmatprep.subr.mxu0 0.0
        %1769 = vmatpush2.msra.mxu0 0.0
        %1770 = vmatprep.subr.mxu0 0.0
        %1771 = vmatpush2.msra.mxu0 0.0
        %1772 = vmatprep.subr.mxu0 0.0
        %1773 = vmatpush2.msra.mxu0 0.0
        %1774 = vmatprep.subr.mxu0 0.0
        %1775 = vmatpush2.msra.mxu0 0.0
        %1776 = vmatprep.subr.mxu0 0.0
        %1777 = vmatpush2.msra.mxu0 0.0
        %1778 = vmatprep.subr.mxu0 0.0
        %1779 = vmatpush2.msra.mxu0 0.0
        %1780 = vmatprep.mubr.f32.mxu0 0.0
        %1781 = vmatmul.mubr.f32.gmra.mxu0 %v1714
        %v1782 = vpop.f32.mrf.mxu0
        %v1783 = vadd.f32 0.0, %v1782
        %v1784 = vpop.f32.mrf.mxu0
        %v1785 = vadd.f32 0.0, %v1784
        %1786 = vdwg.mxu0
        %v1788 = vsel %vm543, %v1657, 0
        %1790 = vmatprep.subr.mxu0 0.0
        %1791 = vmatpush1.msra.mxu0 0.0
        %1792 = vmatprep.subr.mxu0 0.0
        %1793 = vmatpush1.msra.mxu0 0.0
        %1794 = vmatprep.subr.mxu0 0.0
        %1795 = vmatpush1.msra.mxu0 0.0
        %1796 = vmatprep.subr.mxu0 0.0
        %1797 = vmatpush1.msra.mxu0 0.0
        %1798 = vmatprep.subr.mxu0 0.0
        %1799 = vmatpush1.msra.mxu0 0.0
        %1800 = vmatprep.subr.mxu0 0.0
        %1801 = vmatpush1.msra.mxu0 0.0
        %1802 = vmatprep.subr.mxu0 0.0
        %1803 = vmatpush1.msra.mxu0 0.0
        %1804 = vmatprep.subr.mxu0 0.0
        %1805 = vmatpush1.msra.mxu0 0.0
        %1806 = vmatprep.subr.mxu0 %v485
        %1807 = vmatpush1.msra.mxu0 %v484
        %1808 = vmatprep.subr.mxu0 %v483
        %1809 = vmatpush1.msra.mxu0 %v482
        %1810 = vmatprep.subr.mxu0 %v481
        %1811 = vmatpush1.msra.mxu0 %v480
        %1812 = vmatprep.subr.mxu0 %v479
        %1813 = vmatpush1.msra.mxu0 %v478
        %1814 = vmatprep.subr.mxu0 %v477
        %1815 = vmatpush1.msra.mxu0 %v476
        %1816 = vmatprep.subr.mxu0 %v475
        %1817 = vmatpush1.msra.mxu0 %v474
        %1818 = vmatprep.subr.mxu0 %v473
        %1819 = vmatpush1.msra.mxu0 %v472
        %1820 = vmatprep.subr.mxu0 %v471
        %1821 = vmatpush1.msra.mxu0 %v470
        %1822 = vmatprep.subr.mxu0 0.0
        %1823 = vmatpush2.msra.mxu0 0.0
        %1824 = vmatprep.subr.mxu0 0.0
        %1825 = vmatpush2.msra.mxu0 0.0
        %1826 = vmatprep.subr.mxu0 0.0
        %1827 = vmatpush2.msra.mxu0 0.0
        %1828 = vmatprep.subr.mxu0 0.0
        %1829 = vmatpush2.msra.mxu0 0.0
        %1830 = vmatprep.subr.mxu0 0.0
        %1831 = vmatpush2.msra.mxu0 0.0
        %1832 = vmatprep.subr.mxu0 0.0
        %1833 = vmatpush2.msra.mxu0 0.0
        %1834 = vmatprep.subr.mxu0 0.0
        %1835 = vmatpush2.msra.mxu0 0.0
        %1836 = vmatprep.subr.mxu0 0.0
        %1837 = vmatpush2.msra.mxu0 0.0
        %1838 = vmatprep.subr.mxu0 0.0
        %1839 = vmatpush2.msra.mxu0 0.0
        %1840 = vmatprep.subr.mxu0 0.0
        %1841 = vmatpush2.msra.mxu0 0.0
        %1842 = vmatprep.subr.mxu0 0.0
        %1843 = vmatpush2.msra.mxu0 0.0
        %1844 = vmatprep.subr.mxu0 0.0
        %1845 = vmatpush2.msra.mxu0 0.0
        %1846 = vmatprep.subr.mxu0 0.0
        %1847 = vmatpush2.msra.mxu0 0.0
        %1848 = vmatprep.subr.mxu0 0.0
        %1849 = vmatpush2.msra.mxu0 0.0
        %1850 = vmatprep.subr.mxu0 0.0
        %1851 = vmatpush2.msra.mxu0 0.0
        %1852 = vmatprep.subr.mxu0 0.0
        %1853 = vmatpush2.msra.mxu0 0.0
        %1854 = vmatprep.mubr.f32.mxu0 0.0
        %1855 = vmatmul.mubr.f32.gmra.mxu0 %v1788
        %v1856 = vpop.f32.mrf.mxu0
        %v1857 = vadd.f32 0.0, %v1856
        %v1858 = vpop.f32.mrf.mxu0
        %v1859 = vadd.f32 0.0, %v1858
        %1860 = vdwg.mxu0
        %v1861 = vld [vmem:[%s3] sm:$0xff]
        %1863 = vset.pattern.permute.xlu0 0
        %1864 = vperm.xlu0 %1863, %v1861
        %v1865 = vpop.permute.xlu0 %1864
        %v1868 = vlaneseq
        %v1869 = vshrl.u32 %v1868, 7
        %v1870 = vsub.s32 0, %v1869
        %v1871 = vrot.slane %v1655, %v1870
        %v1872 = vlaneseq
        %v1873 = vshrl.u32 %v1872, 7
        %v1874 = vsub.s32 4, %v1873
        %v1875 = vrot.slane %v1655, %v1874
        %v1878 = vlaneseq
        %v1879 = vshrl.u32 %v1878, 7
        %v1880 = vsub.s32 0, %v1879
        %v1881 = vrot.slane %v1871, %v1880
        %v1882 = vlaneseq
        %v1883 = vshrl.u32 %v1882, 7
        %v1884 = vsub.s32 0, %v1883
        %v1885 = vrot.slane %v1875, %v1884
        %v1886 = vmul.f32 %v1865, %v1881
        %v1887 = vmul.f32 %v1865, %v1885
        %1888 = vset.pattern.permute.xlu0 1
        %1889 = vperm.xlu0 %1888, %v1861
        %v1890 = vpop.permute.xlu0 %1889
        %v1892 = vlaneseq
        %v1893 = vshrl.u32 %v1892, 7
        %v1894 = vsub.s32 1, %v1893
        %v1895 = vrot.slane %v1655, %v1894
        %v1896 = vlaneseq
        %v1897 = vshrl.u32 %v1896, 7
        %v1898 = vsub.s32 5, %v1897
        %v1899 = vrot.slane %v1655, %v1898
        %v1902 = vlaneseq
        %v1903 = vshrl.u32 %v1902, 7
        %v1904 = vsub.s32 1, %v1903
        %v1905 = vrot.slane %v1895, %v1904
        %v1906 = vlaneseq
        %v1907 = vshrl.u32 %v1906, 7
        %v1908 = vsub.s32 1, %v1907
        %v1909 = vrot.slane %v1899, %v1908
        %v1910 = vmul.f32 %v1890, %v1905
        %v1911 = vmul.f32 %v1890, %v1909
        %v1912 = vadd.f32 %v1886, %v1910
        %v1913 = vadd.f32 %v1887, %v1911
        %1914 = vset.pattern.permute.xlu0 2
        %1915 = vperm.xlu0 %1914, %v1861
        %v1916 = vpop.permute.xlu0 %1915
        %v1918 = vlaneseq
        %v1919 = vshrl.u32 %v1918, 7
        %v1920 = vsub.s32 2, %v1919
        %v1921 = vrot.slane %v1655, %v1920
        %v1922 = vlaneseq
        %v1923 = vshrl.u32 %v1922, 7
        %v1924 = vsub.s32 6, %v1923
        %v1925 = vrot.slane %v1655, %v1924
        %v1928 = vlaneseq
        %v1929 = vshrl.u32 %v1928, 7
        %v1930 = vsub.s32 2, %v1929
        %v1931 = vrot.slane %v1921, %v1930
        %v1932 = vlaneseq
        %v1933 = vshrl.u32 %v1932, 7
        %v1934 = vsub.s32 2, %v1933
        %v1935 = vrot.slane %v1925, %v1934
        %v1936 = vmul.f32 %v1916, %v1931
        %v1937 = vmul.f32 %v1916, %v1935
        %v1938 = vadd.f32 %v1912, %v1936
        %v1939 = vadd.f32 %v1913, %v1937
        %1940 = vset.pattern.permute.xlu0 3
        %1941 = vperm.xlu0 %1940, %v1861
        %v1942 = vpop.permute.xlu0 %1941
        %v1944 = vlaneseq
        %v1945 = vshrl.u32 %v1944, 7
        %v1946 = vsub.s32 3, %v1945
        %v1947 = vrot.slane %v1655, %v1946
        %v1948 = vlaneseq
        %v1949 = vshrl.u32 %v1948, 7
        %v1950 = vsub.s32 7, %v1949
        %v1951 = vrot.slane %v1655, %v1950
        %v1954 = vlaneseq
        %v1955 = vshrl.u32 %v1954, 7
        %v1956 = vsub.s32 3, %v1955
        %v1957 = vrot.slane %v1947, %v1956
        %v1958 = vlaneseq
        %v1959 = vshrl.u32 %v1958, 7
        %v1960 = vsub.s32 3, %v1959
        %v1961 = vrot.slane %v1951, %v1960
        %v1962 = vmul.f32 %v1942, %v1957
        %v1963 = vmul.f32 %v1942, %v1961
        %v1964 = vadd.f32 %v1938, %v1962
        %v1965 = vadd.f32 %v1939, %v1963
        %v1966 = vld [vmem:[%s4] sm:$0xff]
        %1968 = vset.pattern.permute.xlu0 0
        %1969 = vperm.xlu0 %1968, %v1966
        %v1970 = vpop.permute.xlu0 %1969
        %v1972 = vmul.f32 %v1964, %v1970
        %v1973 = vmul.f32 %v1965, %v1970
        %v1974 = vld [vmem:[%s5] sm:$0xff]
        %1976 = vset.pattern.permute.xlu0 0
        %1977 = vperm.xlu0 %1976, %v1974
        %v1978 = vpop.permute.xlu0 %1977
        %v1980 = vadd.f32 %v1972, %v1978
        %v1981 = vadd.f32 %v1973, %v1978
        %v1982 = vmul.f32 %v1602, 0.25
        %v1983 = vmul.f32 %v1603, 0.25
        %v1984 = vadd.f32 %v1982, %v1980
        %v1985 = vadd.f32 %v1983, %v1981
        %vm1986 = vcmp.gt.f32.partialorder %v1984, 0.5
        %vm1987 = vcmp.gt.f32.partialorder %v1985, 0.5
        %v1988 = vsel %vm1986, 1, 0
        %v1989 = vsel %vm1987, 1, 0
        %v1990 = vcvt.s32.f32 %v1988
        %v1991 = vcvt.s32.f32 %v1989
        %v1992 = vmul.f32 %v1616, 0.25
        %v1993 = vmul.f32 %v1617, 0.25
        %v1994 = vadd.f32 %v1992, %v1783
        %v1995 = vadd.f32 %v1993, %v1785
        %vm1996 = vcmp.gt.f32.partialorder %v1994, 0.5
        %vm1997 = vcmp.gt.f32.partialorder %v1995, 0.5
        %v1998 = vsel %vm1996, 1, 0
        %v1999 = vsel %vm1997, 1, 0
        %v2000 = vcvt.s32.f32 %v1998
        %v2001 = vcvt.s32.f32 %v1999
        %vm2002 = vcmp.eq.f32.partialorder %v2000, %v1990
        %vm2003 = vcmp.eq.f32.partialorder %v2001, %v1991
        %v2004 = vsel %vm2002, 1, 0
        %v2005 = vsel %vm2003, 1, 0
        %v2006 = vcvt.s32.f32 %v2004
        %v2007 = vcvt.s32.f32 %v2005
        %v2008 = vrot.slane %v2006, 4
        %v2009 = vadd.f32 %v2006, %v2008
        %v2010 = vrot.slane %v2009, 2
        %v2011 = vadd.f32 %v2009, %v2010
        %v2012 = vrot.slane %v2011, 1
        %v2013 = vadd.f32 %v2011, %v2012
        %v2014 = vrot.slane %v2007, 4
        %v2015 = vadd.f32 %v2007, %v2014
        %v2016 = vrot.slane %v2015, 2
        %v2017 = vadd.f32 %v2015, %v2016
        %v2018 = vrot.slane %v2017, 1
        %v2019 = vadd.f32 %v2017, %v2018
        %v2020 = vmul.f32 %v2013, 0.125
        %v2021 = vmul.f32 %v2019, 0.125
        %v2022 = vsub.f32 1.0, %v2020
        %v2023 = vsub.f32 1.0, %v2021
        %v2024 = vcombine.high %v1655, %v1655
        %v2026 = vmul.f32 %v2022, %v1655
        %v2027 = vmul.f32 %v2023, %v2024
        %v2028 = vmul.f32 %v2020, %v1857
        %v2029 = vmul.f32 %v2021, %v1859
        %v2030 = vadd.f32 %v2026, %v2028
        %v2031 = vadd.f32 %v2027, %v2029
        %v2034 = vcombine.low %v2030, %v2031
        %s2036 = scalar_lea.vmem %s466, 24 [#allocation8]
        %2037 = vst [vmem:[%s2036] sm:$0xff] %v2034
        %s2038 = sand.u32 %s255, 1
        %s2039 = scalar_lea.sflag [#allocation4], %s2038
        %s2040 = sand.u32 %s255, 1
        %s2041 = smul.addr %s2040, 32
        %s2042 = scalar_lea.vmem [#allocation8], %s2041
        // Predicated region
        $region106: #{tpu_custom_call.1} parent=92 // pred_check
          %p2043 = pneg %p265
        $region107: #{tpu_custom_call.1} parent=92 // pred_check_branch
          %2045 = sbr.rel (%p2043) target = $region109
        $region108: #{tpu_custom_call.1} parent=92 // pred_region
          %s2046 = smul.u32 2, %s32
          %s2048 = ssub.s32 512, 512
          %2049 = vsyncadd %s2039, %s2048
          %s2050 = smul.addr %s31, 2
          %s2051 = sadd.s32 %s2046, %s2050
          %s2052 = smul.addr %s2051, 64
          %s2053 = scalar_lea.hbm %s9, %s2052
          %s2054 = sshll.u32 %s2042, 4
          %s2055 = int_to_ptr.vmem [resolvable:$true] %s2054
          %2060 = dma.vmem_to_hbm [thread:$0]  %s2055, 512, %s2053, %s2039, 128, 256, 8
        $region109: #{tpu_custom_call.1} parent=92 // pred_fallthru
          _
      $region93: #{tpu_custom_call.1} parent=5 // pred_fallthru
        _
      %p2061 = scmp.le.s32.totalorder 2, %s22
      // Predicated region
      $region110: #{tpu_custom_call.1} parent=5 // pred_check
        %p2062 = pneg %p2061
      $region111: #{tpu_custom_call.1} parent=5 // pred_check_branch
        %2064 = sbr.rel (%p2062) target = $region113
      $region112: #{tpu_custom_call.1} parent=5 // pred_region
        %s2065 = ssub.s32 %s22, 2
        // Predicated region
        $region114: #{tpu_custom_call.1} parent=112 // pred_check
          %p2066 = pneg %p271
        $region115: #{tpu_custom_call.1} parent=112 // pred_check_branch
          %2068 = sbr.rel (%p2066) target = $region117
        $region116: #{tpu_custom_call.1} parent=112 // pred_region
          %s2069 = sand.u32 %s256, 1
          %s2070 = scalar_lea.sflag [#allocation4], %s2069
          %s2071 = sand.u32 %s256, 1
          %s2072 = smul.addr %s2071, 32
          %s2073 = scalar_lea.vmem [#allocation8], %s2072
          %2074 = dma.done %s2070, 512
        $region117: #{tpu_custom_call.1} parent=112 // pred_fallthru
          _
      $region113: #{tpu_custom_call.1} parent=5 // pred_fallthru
        _
    $region6: #{tpu_custom_call.1} parent=1 // loop_footer
      %s26 = sadd.s32 1, %s22
    $region7: #{tpu_custom_call.1} parent=1 // loop_footer_branch
      %21 = sbr.rel target = $region3
    $region8: #{tpu_custom_call.1} parent=1 // loop_exit
      _
    %2075 = vsyncpa [#allocation3], 1
    %s2076 = scalar_lea.sflag [#allocation3], 1
    %2077 = vsyncpa %s2076, 1
    %2078 = vsyncpa [#allocation7], 1
    %2079 = vsyncpa [#allocation4], 1
    %s2080 = scalar_lea.sflag [#allocation4], 1
    %2081 = vsyncpa %s2080, 1

</llo_original>
